<compile_context>
chip_gen: v6e
topology: v6e:2x2x1
jax: 0.10.0
libtpu: 0.0.40
codegen_flags: <defaults>
</compile_context>

<pallas_src>
import jax
import jax.numpy as jnp
from jax import lax
from jax.experimental import pallas as pl
from jax.experimental.pallas import tpu as pltpu

EPS = 1e-5


def _rup(x, m):
    return -(-x // m) * m


# ------------------------------ pass 1: conv tile -> per-tile [sum, sum_sq] -------------
def _conv_stats_kernel(x_ref, w_ref, stats_ref):
    # x_ref:     (1, Tr, Wo, 54)  bf16 column-pair-packed im2col tile
    # w_ref:     (54, 128)        bf16 block-diagonal duplicated conv weight
    # stats_ref: (1, 1, 2, 128)   f32 -> row 0: sum, row 1: sum of squares
    #                             (lanes [0:64] = even conv columns, [64:128] = odd)
    _, tr, wo, k2 = x_ref.shape
    c2 = w_ref.shape[1]
    a = x_ref[...].reshape(tr * wo, k2)                                   # leading-dim merge (free)
    conv = jnp.dot(a, w_ref[...], preferred_element_type=jnp.float32)     # (Tr*Wo, 128)
    s = jnp.sum(conv, axis=0, keepdims=True)                              # (1, 128)
    sq = jnp.sum(conv * conv, axis=0, keepdims=True)                      # (1, 128)
    stats_ref[...] = jnp.concatenate([s, sq], axis=0).reshape(1, 1, 2, c2)


# ------------------- pass 2: conv (recomputed) + BN scale/shift + ReLU + maxpool --------
def _bn_relu_pool_kernel(xb_ref, xh_ref, w_ref, aff_ref, o_ref):
    # xb_ref:  (1, 2*To, Wo, 54) bf16 packed im2col, conv rows [2*t*To, 2*t*To + 2*To)
    # xh_ref:  (1, 1, Wo, 54)    bf16 packed im2col, conv row 2*t*To - 1 (clamped; zeroed at t==0)
    # w_ref:   (54, 128)         bf16 block-diagonal conv weight (two copies of (27, 64))
    # aff_ref: (2, 128)          f32: row 0 = scale||scale, row 1 = shift||shift
    # o_ref:   (1, To, Wo*64)    f32 lane-dense pooled output tile
    _, rb, wo, k2 = xb_ref.shape
    c2 = w_ref.shape[1]
    cout = c2 // 2
    to = rb // 2

    scale = aff_ref[0:1, :]
    shift = aff_ref[1:2, :]

    def conv_bn_relu(a2d):
        # (M, 54) bf16 -> packed (M, 128) f32: lanes [0:64] conv col 2*ow, [64:128] col 2*ow+1
        c = jnp.dot(a2d, w_ref[...], preferred_element_type=jnp.float32)
        return jnp.maximum(c * scale + shift, 0.0)                        # BN + ReLU (f32)

    def col_pool(y):
        # (R, Wo, 128) -> (R, Wo, 64): max over conv cols 2*ow-1, 2*ow, 2*ow+1.
        # NOTE: zero padding stands in for -inf ONLY because ReLU ran first (y >= 0) and
        # every pool window contains at least one real element; do not reorder the epilogue.
        c0 = y[..., :cout]                                  # conv col 2*ow
        c1 = y[..., cout:]                                  # conv col 2*ow + 1
        cm1 = pltpu.roll(y, shift=1, axis=1)[..., cout:]    # conv col 2*ow - 1 (wraps at ow==0)
        ow_idx = lax.broadcasted_iota(jnp.int32, cm1.shape, 1)
        cm1 = jnp.where(ow_idx == 0, 0.0, cm1)              # left padding column (post-ReLU zero)
        return jnp.maximum(jnp.maximum(c0, c1), cm1)

    # body rows: one lane-dense dot for the whole tile
    yb = conv_bn_relu(xb_ref[...].reshape(rb * wo, k2)).reshape(rb, wo, c2)
    cb = col_pool(yb)                                       # (2*To, Wo, 64)

    # halo row (conv row 2*t*To - 1): tiny separate dot; only feeds pooled row 0.
    yh = conv_bn_relu(xh_ref[...].reshape(wo, k2)).reshape(1, wo, c2)
    ch = col_pool(yh)                                       # (1, Wo, 64)
    # first tile: the halo is the pool's top padding -> zero it (valid because post-ReLU)
    ch = ch * jnp.where(pl.program_id(1) == 0, 0.0, 1.0)

    # row pool: pooled row j = max(conv rows 2j-1, 2j, 2j+1)
    eo = cb.reshape(to, 2, wo, cout)                        # leading-dim split (free)
    even = eo[:, 0]
    odd = eo[:, 1]
    even_odd = jnp.maximum(even, odd)                       # rows 2j, 2j+1
    if to > 1:
        prev = jnp.concatenate([ch, odd[: to - 1]], axis=0)  # rows 2j-1 (small pooled-size copy)
    else:
        prev = ch
    out = jnp.maximum(even_odd, prev)                       # (To, Wo, 64)
    o_ref[...] = out.reshape(1, to, wo * cout)              # unmasked, lane-dense store


# ------------------------------ VMEM estimates (lane-padded) ----------------------------
def _pass1_vmem_bytes(tr, wo, k2):
    inp = 2 * tr * _rup(wo, 16) * 128 * 2            # double-buffered bf16 block (54 -> 128 lanes)
    wgt = 2 * _rup(k2, 16) * 128 * 2
    tmp = 4 * tr * wo * 128 * 4                      # f32 conv / square temporaries (conservative)
    out = 2 * 8 * 128 * 4
    return inp + wgt + tmp + out


def _pass2_vmem_bytes(to, wo, k2, cout):
    rb = 2 * to
    inp = 2 * rb * _rup(wo, 16) * 128 * 2            # double-buffered body block
    halo = 2 * _rup(wo, 16) * 128 * 2
    wgt = 2 * _rup(k2, 16) * 128 * 2 + 2 * 8 * 128 * 4
    outb = 2 * _rup(to, 8) * wo * cout * 4           # double-buffered f32 output tile
    tmp = 4 * rb * wo * 128 * 4                      # f32 conv/bn/pool temporaries (conservative)
    return inp + halo + wgt + outb + tmp


def fe_resnet_forward(x_nchw, w_oihw, gamma, beta):
    """x_nchw: (N, 3, H, W) f32; w_oihw: (Cout, 3, 3, 3) f32; gamma/beta: (Cout,) f32."""
    n, cin, h, w = x_nchw.shape
    cout = w_oihw.shape[0]
    assert h % 2 == 0 and w % 2 == 0, "even spatial dims assumed for the pool halo/pair scheme"
    ho, wo = h // 2, w // 2
    k = 9 * cin
    k2 = 2 * k
    c2 = 2 * cout

    # ---- glue: NHWC, conv zero-pad, im2col with adjacent column PAIRS packed on the minor
    # axis: (N, H, Wo, 54).  Same HBM bytes as plain im2col, ~2x better lane/VMEM use.
    # TODO(synk): on v5e/v6e the im2col is still ~9x the raw-input HBM traffic; building the
    # taps in-kernel from a raw (rows+2, W+2, 3) block would cut input bytes ~5-8x more.
    x_nhwc = jnp.transpose(x_nchw, (0, 2, 3, 1))
    x_pad = jnp.pad(x_nhwc, ((0, 0), (1, 1), (1, 1), (0, 0)))
    taps = [x_pad[:, kh:kh + h, kw:kw + w, :] for kh in range(3) for kw in range(3)]
    im2col = jnp.concatenate(taps, axis=-1).reshape(n, h, wo, k2).astype(jnp.bfloat16)

    # block-diagonal weight: output lanes [0:64] = conv of even cols, [64:128] = odd cols
    w_flat = jnp.transpose(w_oihw, (2, 3, 1, 0)).reshape(k, cout).astype(jnp.float32)
    zeros = jnp.zeros_like(w_flat)
    w2 = jnp.concatenate(
        [jnp.concatenate([w_flat, zeros], axis=1),
         jnp.concatenate([zeros, w_flat], axis=1)], axis=0).astype(jnp.bfloat16)      # (54, 128)

    # ---- per-generation VMEM limit and VMEM-budget-derived row tiles ----
    try:
        vmem_cap = int(pltpu.get_tpu_info().vmem_capacity_bytes)
    except Exception:
        vmem_cap = 64 * 1024 * 1024
    vmem_limit = max(min(int(vmem_cap * 0.75), vmem_cap - (8 << 20)), 32 << 20)
    tile_budget = int(vmem_limit * 0.7)

    def pick_tile(total, vmem_fn, mult):
        cands = [t for t in range(total, 0, -1)
                 if total % t == 0 and (t % mult == 0 or t == total)]
        for t in cands:   # prefer >= 2 grid steps (2-TC chips) and a VMEM fit
            if vmem_fn(t) <= tile_budget and n * (total // t) >= 2:
                return t
        for t in cands:
            if vmem_fn(t) <= tile_budget:
                return t
        return cands[-1]

    cparams = pltpu.CompilerParams(dimension_semantics=("parallel", "parallel"),
                                   vmem_limit_bytes=vmem_limit)

    # ---- pass 1: per-tile conv sum / sum-of-squares over (batch, conv-row tiles) ----
    tr = pick_tile(h, lambda t: _pass1_vmem_bytes(t, wo, k2), mult=1)
    nt1 = h // tr
    stats = pl.pallas_call(
        _conv_stats_kernel,
        out_shape=jax.ShapeDtypeStruct((n, nt1, 2, c2), jnp.float32),
        grid=(n, nt1),
        in_specs=[
            pl.BlockSpec((1, tr, wo, k2), lambda b, t: (b, t, 0, 0)),
            pl.BlockSpec((k2, c2), lambda b, t: (0, 0)),
        ],
        out_specs=pl.BlockSpec((1, 1, 2, c2), lambda b, t: (b, t, 0, 0)),
        compiler_params=cparams,
    )(im2col, w2)

    # ---- tiny reduction + BN (train-mode, biased var); fold gamma/beta into scale/shift ----
    # TODO(synk): E[x^2]-E[x]^2 in f32 can lose precision at very large N*H*W; switch to
    # per-tile mean-centered partials if this runs at ImageNet batch sizes.
    tot = jnp.sum(stats, axis=(0, 1))                    # (2, 128)
    s = tot[0, :cout] + tot[0, cout:]
    sq = tot[1, :cout] + tot[1, cout:]
    cnt = jnp.float32(n * h * w)
    mean = s / cnt
    var = jnp.maximum(sq / cnt - mean * mean, 0.0)
    scale = gamma.astype(jnp.float32) * lax.rsqrt(var + EPS)
    shift = beta.astype(jnp.float32) - mean * scale
    affine = jnp.stack([jnp.tile(scale, 2), jnp.tile(shift, 2)], axis=0)   # (2, 128)

    # ---- pass 2: conv (recomputed) + BN + ReLU + 3x3/s2/p1 max pool, lane-dense output ----
    to = pick_tile(ho, lambda t: _pass2_vmem_bytes(t, wo, k2, cout), mult=8)
    nt2 = ho // to
    out = pl.pallas_call(
        _bn_relu_pool_kernel,
        out_shape=jax.ShapeDtypeStruct((n, ho, wo * cout), jnp.float32),
        grid=(n, nt2),
        in_specs=[
            pl.BlockSpec((1, 2 * to, wo, k2), lambda b, t: (b, t, 0, 0)),
            pl.BlockSpec((1, 1, wo, k2),
                         lambda b, t: (b, jnp.maximum(2 * to * t - 1, 0), 0, 0)),
            pl.BlockSpec((k2, c2), lambda b, t: (0, 0)),
            pl.BlockSpec((2, c2), lambda b, t: (0, 0)),
        ],
        out_specs=pl.BlockSpec((1, to, wo * cout), lambda b, t: (b, t, 0)),
        compiler_params=cparams,
    )(im2col, im2col, w2, affine)

    # ---- glue: back to the PyTorch NCHW convention ----
    # TODO(synk): if the downstream consumer accepts NHWC (or bf16), return `out` reshaped
    # to (N, Ho, Wo, C) directly and skip this full-output f32 transpose round trip.
    return jnp.transpose(out.reshape(n, ho, wo, cout), (0, 3, 1, 2))


if __name__ == "__main__":
    key = jax.random.PRNGKey(0)
    kx, kw = jax.random.split(key)

    n, cin, h, w = 2, 3, 16, 16
    cout = 64

    x = jax.random.normal(kx, (n, cin, h, w), dtype=jnp.float32)
    # kaiming_normal_(mode='fan_out', nonlinearity='relu'): std = sqrt(2 / (Cout*3*3))
    fan_out = cout * 3 * 3
    wgt = jax.random.normal(kw, (cout, cin, 3, 3), dtype=jnp.float32) * jnp.sqrt(2.0 / fan_out)
    gamma = jnp.ones((cout,), jnp.float32)   # BN weight init = 1
    beta = jnp.zeros((cout,), jnp.float32)   # BN bias init = 0

    out = jax.jit(fe_resnet_forward)(x, wgt, gamma, beta)
    out = jax.block_until_ready(out)
    assert out.shape == (n, cout, h // 2, w // 2), out.shape

    # pure-JAX reference (same bf16-rounded inputs, f32 math elsewhere)
    xr = x.astype(jnp.bfloat16).astype(jnp.float32)
    wr = wgt.astype(jnp.bfloat16).astype(jnp.float32)
    conv = lax.conv_general_dilated(
        jnp.transpose(xr, (0, 2, 3, 1)), jnp.transpose(wr, (2, 3, 1, 0)),
        window_strides=(1, 1), padding=((1, 1), (1, 1)),
        dimension_numbers=("NHWC", "HWIO", "NHWC"), precision=lax.Precision.HIGHEST)
    mu = jnp.mean(conv, axis=(0, 1, 2))
    va = jnp.mean((conv - mu) ** 2, axis=(0, 1, 2))
    yref = jnp.maximum((conv - mu) * lax.rsqrt(va + EPS) * gamma + beta, 0.0)
    ref = lax.reduce_window(yref, -jnp.inf, lax.max, (1, 3, 3, 1), (1, 2, 2, 1),
                            padding=((0, 0), (1, 1), (1, 1), (0, 0)))
    ref = jnp.transpose(ref, (0, 3, 1, 2))
    assert jnp.allclose(out, ref, atol=5e-3, rtol=5e-3), float(jnp.max(jnp.abs(out - ref)))

    print("KERNEL_OK")
</pallas_src>

<mosaic_0001>
module attributes {stable_mosaic.version = 11 : i64} {
  func.func @_conv_stats_kernel(%arg0: i32, %arg1: i32, %arg2: memref<1x16x8x54xbf16, #tpu.memory_space<vmem>>, %arg3: memref<54x128xbf16, #tpu.memory_space<vmem>>, %arg4: memref<1x1x2x128xf32, #tpu.memory_space<vmem>>) attributes {dimension_semantics = [#tpu.dimension_semantics<parallel>, #tpu.dimension_semantics<parallel>], iteration_bounds = array<i64: 2, 1>, scalar_prefetch = 0 : i64, scratch_operands = 0 : i64, tpu.core_type = #tpu.core_type<tc>, window_params = [{transform_indices = @transform_0, window_bounds = array<i64: 1, 16, 8, 54>}, {pipeline_mode = #tpu.pipeline_mode<synchronous>, transform_indices = @transform_1, window_bounds = array<i64: 54, 128>}, {transform_indices = @transform_2, window_bounds = array<i64: 1, 1, 2, 128>}]} {
    %c0 = arith.constant 0 : index
    %c0_0 = arith.constant 0 : index
    %c0_1 = arith.constant 0 : index
    %c0_2 = arith.constant 0 : index
    %0 = vector.load %arg2[%c0, %c0_0, %c0_1, %c0_2] : memref<1x16x8x54xbf16, #tpu.memory_space<vmem>>, vector<1x16x8x54xbf16>
    %1 = vector.shape_cast %0 : vector<1x16x8x54xbf16> to vector<128x54xbf16>
    %c0_3 = arith.constant 0 : index
    %c0_4 = arith.constant 0 : index
    %2 = vector.load %arg3[%c0_3, %c0_4] : memref<54x128xbf16, #tpu.memory_space<vmem>>, vector<54x128xbf16>
    %cst = arith.constant dense<0.000000e+00> : vector<128x128xf32>
    %3 = tpu.matmul %1, %2, %cst {dimension_numbers = #tpu.dot_dimension_numbers<[1], [0], [0], [1], [0, 0, 1, 1], [], []>} : vector<128x54xbf16>, vector<54x128xbf16>, vector<128x128xf32> -> vector<128x128xf32>
    %cst_5 = arith.constant dense<0.000000e+00> : vector<128xf32>
    %4 = vector.multi_reduction <add>, %3, %cst_5 [0] : vector<128x128xf32> to vector<128xf32>
    %5 = vector.shape_cast %4 : vector<128xf32> to vector<1x128xf32>
    %6 = arith.mulf %3, %3 : vector<128x128xf32>
    %cst_6 = arith.constant dense<0.000000e+00> : vector<128xf32>
    %7 = vector.multi_reduction <add>, %6, %cst_6 [0] : vector<128x128xf32> to vector<128xf32>
    %8 = vector.shape_cast %7 : vector<128xf32> to vector<1x128xf32>
    %9 = tpu.concatenate %5, %8 in 0 : vector<1x128xf32>, vector<1x128xf32> -> vector<2x128xf32>
    %10 = vector.shape_cast %9 : vector<2x128xf32> to vector<1x1x2x128xf32>
    %c0_7 = arith.constant 0 : index
    %c0_8 = arith.constant 0 : index
    %c0_9 = arith.constant 0 : index
    %c0_10 = arith.constant 0 : index
    %11 = vector.load %arg4[%c0_7, %c0_8, %c0_9, %c0_10] : memref<1x1x2x128xf32, #tpu.memory_space<vmem>>, vector<1x1x2x128xf32>
    tpu.vector_store %arg4[%c0_7, %c0_8, %c0_9, %c0_10], %10 {strides = array<i32>} : memref<1x1x2x128xf32, #tpu.memory_space<vmem>>, vector<1x1x2x128xf32>,
    return
  }
  func.func @transform_0(%arg0: i32, %arg1: i32) -> (i32, i32, i32, i32) {
    %c0_i32 = arith.constant 0 : i32
    %c0_i32_0 = arith.constant 0 : i32
    %c0_i32_1 = arith.constant 0 : i32
    return %arg0, %arg1, %c0_i32, %c0_i32_0 : i32, i32, i32, i32
  }
  func.func @transform_1(%arg0: i32, %arg1: i32) -> (i32, i32) {
    %c0_i32 = arith.constant 0 : i32
    %c0_i32_0 = arith.constant 0 : i32
    %c0_i32_1 = arith.constant 0 : i32
    return %c0_i32, %c0_i32_0 : i32, i32
  }
  func.func @transform_2(%arg0: i32, %arg1: i32) -> (i32, i32, i32, i32) {
    %c0_i32 = arith.constant 0 : i32
    %c0_i32_0 = arith.constant 0 : i32
    %c0_i32_1 = arith.constant 0 : i32
    return %arg0, %arg1, %c0_i32, %c0_i32_0 : i32, i32, i32, i32
  }
}

module attributes {stable_mosaic.version = 11 : i64} {
  func.func @_bn_relu_pool_kernel(%arg0: i32, %arg1: i32, %arg2: memref<1x16x8x54xbf16, #tpu.memory_space<vmem>>, %arg3: memref<1x1x8x54xbf16, #tpu.memory_space<vmem>>, %arg4: memref<54x128xbf16, #tpu.memory_space<vmem>>, %arg5: memref<2x128xf32, #tpu.memory_space<vmem>>, %arg6: memref<1x8x512xf32, #tpu.memory_space<vmem>>) attributes {dimension_semantics = [#tpu.dimension_semantics<parallel>, #tpu.dimension_semantics<parallel>], iteration_bounds = array<i64: 2, 1>, scalar_prefetch = 0 : i64, scratch_operands = 0 : i64, tpu.core_type = #tpu.core_type<tc>, window_params = [{transform_indices = @transform_0, window_bounds = array<i64: 1, 16, 8, 54>}, {transform_indices = @transform_1, window_bounds = array<i64: 1, 1, 8, 54>}, {pipeline_mode = #tpu.pipeline_mode<synchronous>, transform_indices = @transform_2, window_bounds = array<i64: 54, 128>}, {pipeline_mode = #tpu.pipeline_mode<synchronous>, transform_indices = @transform_3, window_bounds = array<i64: 2, 128>}, {transform_indices = @transform_4, window_bounds = array<i64: 1, 8, 512>}]} {
    %c0 = arith.constant 0 : index
    %c0_0 = arith.constant 0 : index
    %0 = vector.load %arg5[%c0, %c0_0] : memref<2x128xf32, #tpu.memory_space<vmem>>, vector<1x128xf32>
    %c1 = arith.constant 1 : index
    %c0_1 = arith.constant 0 : index
    %1 = vector.load %arg5[%c1, %c0_1] : memref<2x128xf32, #tpu.memory_space<vmem>>, vector<1x128xf32>
    %c0_2 = arith.constant 0 : index
    %c0_3 = arith.constant 0 : index
    %c0_4 = arith.constant 0 : index
    %c0_5 = arith.constant 0 : index
    %2 = vector.load %arg2[%c0_2, %c0_3, %c0_4, %c0_5] : memref<1x16x8x54xbf16, #tpu.memory_space<vmem>>, vector<1x16x8x54xbf16>
    %3 = vector.shape_cast %2 : vector<1x16x8x54xbf16> to vector<128x54xbf16>
    %c0_6 = arith.constant 0 : index
    %c0_7 = arith.constant 0 : index
    %4 = vector.load %arg4[%c0_6, %c0_7] : memref<54x128xbf16, #tpu.memory_space<vmem>>, vector<54x128xbf16>
    %cst = arith.constant dense<0.000000e+00> : vector<128x128xf32>
    %5 = tpu.matmul %3, %4, %cst {dimension_numbers = #tpu.dot_dimension_numbers<[1], [0], [0], [1], [0, 0, 1, 1], [], []>} : vector<128x54xbf16>, vector<54x128xbf16>, vector<128x128xf32> -> vector<128x128xf32>
    %6 = vector.broadcast %0 : vector<1x128xf32> to vector<128x128xf32>
    %7 = arith.mulf %5, %6 : vector<128x128xf32>
    %8 = vector.broadcast %1 : vector<1x128xf32> to vector<128x128xf32>
    %9 = arith.addf %7, %8 : vector<128x128xf32>
    %cst_8 = arith.constant 0.000000e+00 : f32
    %10 = vector.broadcast %cst_8 : f32 to vector<128x128xf32>
    %11 = arith.maximumf %9, %10 : vector<128x128xf32>
    %12 = vector.shape_cast %11 : vector<128x128xf32> to vector<16x8x128xf32>
    %13 = vector.extract_strided_slice %12 {offsets = [0, 0, 0], sizes = [16, 8, 64], strides = [1, 1, 1]} : vector<16x8x128xf32> to vector<16x8x64xf32>
    %14 = vector.extract_strided_slice %12 {offsets = [0, 0, 64], sizes = [16, 8, 64], strides = [1, 1, 1]} : vector<16x8x128xf32> to vector<16x8x64xf32>
    %c1_i32 = arith.constant 1 : i32
    %15 = tpu.dynamic_rotate %12 by %c1_i32 dim 1 : vector<16x8x128xf32>, i32 -> vector<16x8x128xf32>
    %16 = vector.extract_strided_slice %15 {offsets = [0, 0, 64], sizes = [16, 8, 64], strides = [1, 1, 1]} : vector<16x8x128xf32> to vector<16x8x64xf32>
    %17 = tpu.iota {dimensions = array<i32: 1>} : vector<16x8x64xi32>
    %c0_i32 = arith.constant 0 : i32
    %18 = vector.broadcast %c0_i32 : i32 to vector<16x8x64xi32>
    %19 = arith.cmpi eq, %17, %18 : vector<16x8x64xi32>
    %cst_9 = arith.constant 0.000000e+00 : f32
    %20 = vector.broadcast %cst_9 : f32 to vector<16x8x64xf32>
    %21 = arith.select %19, %20, %16 : vector<16x8x64xi1>, vector<16x8x64xf32>
    %22 = arith.maximumf %13, %14 : vector<16x8x64xf32>
    %23 = arith.maximumf %22, %21 : vector<16x8x64xf32>
    %c0_10 = arith.constant 0 : index
    %c0_11 = arith.constant 0 : index
    %c0_12 = arith.constant 0 : index
    %c0_13 = arith.constant 0 : index
    %24 = vector.load %arg3[%c0_10, %c0_11, %c0_12, %c0_13] : memref<1x1x8x54xbf16, #tpu.memory_space<vmem>>, vector<1x1x8x54xbf16>
    %25 = vector.shape_cast %24 : vector<1x1x8x54xbf16> to vector<8x54xbf16>
    %c0_14 = arith.constant 0 : index
    %c0_15 = arith.constant 0 : index
    %26 = vector.load %arg4[%c0_14, %c0_15] : memref<54x128xbf16, #tpu.memory_space<vmem>>, vector<54x128xbf16>
    %cst_16 = arith.constant dense<0.000000e+00> : vector<8x128xf32>
    %27 = tpu.matmul %25, %26, %cst_16 {dimension_numbers = #tpu.dot_dimension_numbers<[1], [0], [0], [1], [0, 0, 1, 1], [], []>} : vector<8x54xbf16>, vector<54x128xbf16>, vector<8x128xf32> -> vector<8x128xf32>
    %28 = vector.broadcast %0 : vector<1x128xf32> to vector<8x128xf32>
    %29 = arith.mulf %27, %28 : vector<8x128xf32>
    %30 = vector.broadcast %1 : vector<1x128xf32> to vector<8x128xf32>
    %31 = arith.addf %29, %30 : vector<8x128xf32>
    %cst_17 = arith.constant 0.000000e+00 : f32
    %32 = vector.broadcast %cst_17 : f32 to vector<8x128xf32>
    %33 = arith.maximumf %31, %32 : vector<8x128xf32>
    %34 = vector.shape_cast %33 : vector<8x128xf32> to vector<1x8x128xf32>
    %35 = vector.extract_strided_slice %34 {offsets = [0, 0, 0], sizes = [1, 8, 64], strides = [1, 1, 1]} : vector<1x8x128xf32> to vector<1x8x64xf32>
    %36 = vector.extract_strided_slice %34 {offsets = [0, 0, 64], sizes = [1, 8, 64], strides = [1, 1, 1]} : vector<1x8x128xf32> to vector<1x8x64xf32>
    %c1_i32_18 = arith.constant 1 : i32
    %37 = tpu.dynamic_rotate %34 by %c1_i32_18 dim 1 : vector<1x8x128xf32>, i32 -> vector<1x8x128xf32>
    %38 = vector.extract_strided_slice %37 {offsets = [0, 0, 64], sizes = [1, 8, 64], strides = [1, 1, 1]} : vector<1x8x128xf32> to vector<1x8x64xf32>
    %39 = tpu.iota {dimensions = array<i32: 1>} : vector<1x8x64xi32>
    %c0_i32_19 = arith.constant 0 : i32
    %40 = vector.broadcast %c0_i32_19 : i32 to vector<1x8x64xi32>
    %41 = arith.cmpi eq, %39, %40 : vector<1x8x64xi32>
    %cst_20 = arith.constant 0.000000e+00 : f32
    %42 = vector.broadcast %cst_20 : f32 to vector<1x8x64xf32>
    %43 = arith.select %41, %42, %38 : vector<1x8x64xi1>, vector<1x8x64xf32>
    %44 = arith.maximumf %35, %36 : vector<1x8x64xf32>
    %45 = arith.maximumf %44, %43 : vector<1x8x64xf32>
    %c0_i32_21 = arith.constant 0 : i32
    %46 = arith.cmpi eq, %arg1, %c0_i32_21 : i32
    %cst_22 = arith.constant 0.000000e+00 : f32
    %cst_23 = arith.constant 1.000000e+00 : f32
    %47 = arith.select %46, %cst_22, %cst_23 : f32
    %48 = vector.broadcast %47 : f32 to vector<1x8x64xf32>
    %49 = arith.mulf %45, %48 : vector<1x8x64xf32>
    %50 = vector.shape_cast %23 : vector<16x8x64xf32> to vector<8x2x8x64xf32>
    %51 = vector.extract_strided_slice %50 {offsets = [0, 0, 0, 0], sizes = [8, 1, 8, 64], strides = [1, 1, 1, 1]} : vector<8x2x8x64xf32> to vector<8x1x8x64xf32>
    %52 = vector.shape_cast %51 : vector<8x1x8x64xf32> to vector<8x8x64xf32>
    %53 = vector.extract_strided_slice %50 {offsets = [0, 1, 0, 0], sizes = [8, 1, 8, 64], strides = [1, 1, 1, 1]} : vector<8x2x8x64xf32> to vector<8x1x8x64xf32>
    %54 = vector.shape_cast %53 : vector<8x1x8x64xf32> to vector<8x8x64xf32>
    %55 = arith.maximumf %52, %54 : vector<8x8x64xf32>
    %56 = vector.extract_strided_slice %54 {offsets = [0, 0, 0], sizes = [7, 8, 64], strides = [1, 1, 1]} : vector<8x8x64xf32> to vector<7x8x64xf32>
    %57 = tpu.concatenate %49, %56 in 0 : vector<1x8x64xf32>, vector<7x8x64xf32> -> vector<8x8x64xf32>
    %58 = arith.maximumf %55, %57 : vector<8x8x64xf32>
    %59 = vector.shape_cast %58 : vector<8x8x64xf32> to vector<1x8x512xf32>
    %c0_24 = arith.constant 0 : index
    %c0_25 = arith.constant 0 : index
    %c0_26 = arith.constant 0 : index
    %60 = vector.load %arg6[%c0_24, %c0_25, %c0_26] : memref<1x8x512xf32, #tpu.memory_space<vmem>>, vector<1x8x512xf32>
    tpu.vector_store %arg6[%c0_24, %c0_25, %c0_26], %59 {strides = array<i32>} : memref<1x8x512xf32, #tpu.memory_space<vmem>>, vector<1x8x512xf32>,
    return
  }
  func.func @transform_0(%arg0: i32, %arg1: i32) -> (i32, i32, i32, i32) {
    %c0_i32 = arith.constant 0 : i32
    %c0_i32_0 = arith.constant 0 : i32
    %c0_i32_1 = arith.constant 0 : i32
    return %arg0, %arg1, %c0_i32, %c0_i32_0 : i32, i32, i32, i32
  }
  func.func @transform_1(%arg0: i32, %arg1: i32) -> (i32, i32, i32, i32) {
    %c16_i32 = arith.constant 16 : i32
    %0 = arith.muli %c16_i32, %arg1 : i32
    %c1_i32 = arith.constant 1 : i32
    %1 = arith.subi %0, %c1_i32 : i32
    %c0_i32 = arith.constant 0 : i32
    %2 = arith.maxsi %1, %c0_i32 : i32
    %c0_i32_0 = arith.constant 0 : i32
    %c0_i32_1 = arith.constant 0 : i32
    %c0_i32_2 = arith.constant 0 : i32
    return %arg0, %2, %c0_i32_0, %c0_i32_1 : i32, i32, i32, i32
  }
  func.func @transform_2(%arg0: i32, %arg1: i32) -> (i32, i32) {
    %c0_i32 = arith.constant 0 : i32
    %c0_i32_0 = arith.constant 0 : i32
    %c0_i32_1 = arith.constant 0 : i32
    return %c0_i32, %c0_i32_0 : i32, i32
  }
  func.func @transform_3(%arg0: i32, %arg1: i32) -> (i32, i32) {
    %c0_i32 = arith.constant 0 : i32
    %c0_i32_0 = arith.constant 0 : i32
    %c0_i32_1 = arith.constant 0 : i32
    return %c0_i32, %c0_i32_0 : i32, i32
  }
  func.func @transform_4(%arg0: i32, %arg1: i32) -> (i32, i32, i32) {
    %c0_i32 = arith.constant 0 : i32
    %c0_i32_0 = arith.constant 0 : i32
    return %arg0, %arg1, %c0_i32 : i32, i32, i32
  }
}

</mosaic_0001>

<llo_original>
// kernel: tile.13
$region0: #{tile.13}
  #allocation0 [shape = 's32[1]{0}', space=sflag, size = 0x4, scoped, tag = 'scoped memory for tile.13']
  %s0 = inlined_call_operand.vmem [shape: f32[64], index: 0, kind: input, shape index: {}]
  %s1 = inlined_call_operand.vmem [shape: f32[2,64], index: 1, kind: output, shape index: {}]
  // Predicated region
  $region2: #{tile.13} parent=0 // pred_check
    _
  $region3: #{tile.13} parent=0 // pred_check_branch
    %3 = sbr.rel (0) target = $region5
  $region4: #{tile.13} parent=0 // pred_region
    _
  $region5: #{tile.13} parent=0 // pred_fallthru
    _
  %v4 = vld [vmem:[%s0] ss:$0 sm:$0xff]
  %5 = vst [vmem:[%s1] sm:$0x3] %v4

// kernel: tile.18
$region0: #{tile.18}
  %s0 = inlined_call_operand.vmem [shape: f32[2,64], index: 0, kind: input, shape index: {}]
  %s1 = inlined_call_operand.vmem [shape: f32[1,128], index: 1, kind: output, shape index: {}]
  $region1: #{tile.18} parent=0
    #allocation0 [shape = 'u8[4096]{0}', space=vmem, size = 0x1000, scoped, tag = 'scoped mem for output reshape']
    #allocation1 [shape = 'u8[4096]{0}', space=vmem, size = 0x1000, scoped, tag = 'scoped mem for input reshape']
    %s3 = sshll.u32 1, 2
    %s4 = ssub.s32 %s3, 1
    %v5 = vld [vmem:[%s0] sm:%s4]
    %6 = vst [vmem:[#allocation1] sm:%s4] %v5
    %v7 = vld [vmem:[#allocation1] sm:$0x1]
    %vm8 = vcmask 523264
    %9 = vst.msk [vmem:[#allocation0] sm:$0x1] %vm8, %v7
    %s10 = scalar_lea.vmem [#allocation1], 1
    %v11 = vld [vmem:[%s10] sm:$0x1]
    %12 = vrot.lane.b32.xlu0 %v11, 64
    %v13 = vpop.permute.xlu0 %12
    %vm14 = vcmask 1048064
    %15 = vst.msk [vmem:[#allocation0] sm:$0x1] %vm14, %v13
    %s17 = sshll.u32 1, 1
    %s18 = ssub.s32 %s17, 1
    %v20 = vld [vmem:[#allocation0] sm:%s18]
    %s21 = sshll.u32 1, 1
    %s22 = ssub.s32 %s21, 1
    %23 = vst [vmem:[%s1] sm:%s22] %v20

// kernel: fe_resnet_forward.2
$region0: #{fe_resnet_forward.2}
  #allocation0 [shape = 'u32[]', space=smem, size = 0x4, offset = 0x4, fixed_abs, tag = 'smem constant byte address 0x4 - core index']
  #allocation1 [shape = 'u32[144,128]{1,0:T(1,128)}', space=vmem, size = 0x12000, scoped, tag = 'internal scratch']
  %s0 = inlined_call_operand.vmem [shape: bf16[2,16,8,54], index: 0, kind: input, shape index: {}]
  %s1 = inlined_call_operand.vmem [shape: bf16[54,128], index: 1, kind: input, shape index: {}]
  %s2 = inlined_call_operand.vmem [shape: f32[2,1,2,128], index: 2, kind: output, shape index: {}]
  %s3 = sld [smem:[#allocation0]]
  $region41: #{fe_resnet_forward.2} parent=0
    _
  %s5 = ssub.s32 1, %s3
  %s6 = scalar_select 0, %s5, %s3
  loop: start=0, step=1, limit=4
  $region2: #{fe_resnet_forward.2} parent=0 // loop_pre_header
    _
  $region3: #{fe_resnet_forward.2} parent=0 // loop_header
    %s8 = sphi 0, %s12
    %p9 = scmp.ge.s32.totalorder %s8, 4
    %s15 = sphi 0, %s27
    %s16 = sphi 0, %s23
    %s17 = sphi 0, %s15
    %s18 = sphi 0, %s16
    %s19 = sphi 0, %s17
    %s20 = sphi 0, %s18
    %s32 = sphi 0, %s34
    %s35 = sphi 0, %s32
    %s36 = sphi 0, %s35
    %s52 = sphi 0, %s36
    %s56 = sphi 0, %s56
    %s58 = sphi 0, %s56
    %s59 = sphi 0, %s58
    %s73 = sphi 0, %s59
    %s81 = sphi 0, %s83
    %s84 = sphi 0, %s81
    %s85 = sphi 0, %s84
    %s101 = sphi 0, %s85
  $region4: #{fe_resnet_forward.2} parent=0 // loop_header_branch
    %11 = sbr.rel (%p9) target = $region8
  $region5: #{fe_resnet_forward.2} parent=0 // loop_body
    %s13 = ssub.s32 %s8, 1
    %s14 = ssub.s32 %s8, 2
    %s21 = sadd.s32 1, %s16
    %p22 = scmp.ge.s32.totalorder %s21, 1
    %s23 = scalar_select %p22, 0, %s21
    %s24 = sadd.s32 1, %s15
    %s25 = scalar_select %p22, %s24, %s15
    %p26 = scmp.ge.s32.totalorder %s25, 2
    %s27 = scalar_select %p26, 0, %s25
    %s28 = ssub.s32 %s15, %s27
    %s29 = ssub.s32 %s16, %s23
    %s30 = sor.u32 %s28, %s29
    %p31 = scmp.eq.s32.totalorder %s30, 0
    %s33 = sadd.s32 %s32, 1
    %s34 = scalar_select %p31, %s32, %s33
    %p37 = pneg %p31
    %p38 = scmp.eq.s32.totalorder %s8, 1
    %p39 = por %p37, %p38
    %p40 = scmp.ne.s32.totalorder %s32, %s35
    %p41 = scmp.eq.s32.totalorder %s8, 0
    %p42 = por %p40, %p41
    %p43 = scmp.ne.s32.totalorder %s32, %s35
    %p44 = scmp.eq.s32.totalorder %s13, 1
    %p45 = por %p43, %p44
    %p46 = scmp.ne.s32.totalorder %s35, %s36
    %p47 = scmp.eq.s32.totalorder %s13, 0
    %p48 = por %p46, %p47
    %p49 = scmp.ne.s32.totalorder %s35, %s36
    %p50 = scmp.eq.s32.totalorder %s14, 1
    %p51 = por %p49, %p50
    %p53 = scmp.ne.s32.totalorder %s36, %s52
    %p54 = scmp.eq.s32.totalorder %s14, 0
    %p55 = por %p53, %p54
    %s57 = sadd.s32 %s56, 1
    %p60 = scmp.eq.s32.totalorder %s8, 1
    %p61 = scmp.ne.s32.totalorder %s56, %s58
    %p62 = scmp.eq.s32.totalorder %s8, 0
    %p63 = por %p61, %p62
    %p64 = scmp.ne.s32.totalorder %s56, %s58
    %p65 = scmp.eq.s32.totalorder %s13, 1
    %p66 = por %p64, %p65
    %p67 = scmp.ne.s32.totalorder %s58, %s59
    %p68 = scmp.eq.s32.totalorder %s13, 0
    %p69 = por %p67, %p68
    %p70 = scmp.ne.s32.totalorder %s58, %s59
    %p71 = scmp.eq.s32.totalorder %s14, 1
    %p72 = por %p70, %p71
    %p74 = scmp.ne.s32.totalorder %s59, %s73
    %p75 = scmp.eq.s32.totalorder %s14, 0
    %p76 = por %p74, %p75
    %s77 = ssub.s32 %s15, %s27
    %s78 = ssub.s32 %s16, %s23
    %s79 = sor.u32 %s77, %s78
    %p80 = scmp.eq.s32.totalorder %s79, 0
    %s82 = sadd.s32 %s81, 1
    %s83 = scalar_select %p80, %s81, %s82
    %p86 = pneg %p80
    %p87 = scmp.eq.s32.totalorder %s8, 1
    %p88 = por %p86, %p87
    %p89 = scmp.ne.s32.totalorder %s81, %s84
    %p90 = scmp.eq.s32.totalorder %s8, 0
    %p91 = por %p89, %p90
    %p92 = scmp.ne.s32.totalorder %s81, %s84
    %p93 = scmp.eq.s32.totalorder %s13, 1
    %p94 = por %p92, %p93
    %p95 = scmp.ne.s32.totalorder %s84, %s85
    %p96 = scmp.eq.s32.totalorder %s13, 0
    %p97 = por %p95, %p96
    %p98 = scmp.ne.s32.totalorder %s84, %s85
    %p99 = scmp.eq.s32.totalorder %s14, 1
    %p100 = por %p98, %p99
    %p102 = scmp.ne.s32.totalorder %s85, %s101
    %p103 = scmp.eq.s32.totalorder %s14, 0
    %p104 = por %p102, %p103
    %p105 = scmp.le.s32.totalorder 1, %s8
    %p106 = scmp.lt.s32.totalorder %s8, 3
    %p107 = pnand %p105, %p106
    %p108 = pneg %p107
    // Predicated region
    $region9: #{fe_resnet_forward.2} parent=5 // pred_check
      _
    $region10: #{fe_resnet_forward.2} parent=5 // pred_check_branch
      %110 = sbr.rel (%p107) target = $region12
    $region11: #{fe_resnet_forward.2} parent=5 // pred_region
      %s111 = ssub.s32 %s8, 1
      // Predicated region
      $region13: #{fe_resnet_forward.2} parent=11 // pred_check
        %p112 = pneg %p69
      $region14: #{fe_resnet_forward.2} parent=11 // pred_check_branch
        %114 = sbr.rel (%p112) target = $region16
      $region15: #{fe_resnet_forward.2} parent=11 // pred_region
        _
      $region16: #{fe_resnet_forward.2} parent=11 // pred_fallthru
        _
    $region12: #{fe_resnet_forward.2} parent=5 // pred_fallthru
      _
    %p115 = scmp.lt.s32.totalorder %s8, 2
    // Predicated region
    $region17: #{fe_resnet_forward.2} parent=5 // pred_check
      %p116 = pneg %p115
    $region18: #{fe_resnet_forward.2} parent=5 // pred_check_branch
      %118 = sbr.rel (%p116) target = $region20
    $region19: #{fe_resnet_forward.2} parent=5 // pred_region
      // Predicated region
      $region21: #{fe_resnet_forward.2} parent=19 // pred_check
        %p119 = pneg %p42
      $region22: #{fe_resnet_forward.2} parent=19 // pred_check_branch
        %121 = sbr.rel (%p119) target = $region24
      $region23: #{fe_resnet_forward.2} parent=19 // pred_region
        %s122 = smul.u32 16, %s16
        %p123 = scmp.lt.s32.totalorder %s15, 1
        %s124 = scalar_select %p123, %s15, 1
        %p125 = scmp.lt.s32.totalorder %s122, 15
        %s126 = scalar_select %p125, %s122, 15
        %s127 = smul.addr %s124, 16
        %s128 = sadd.s32 %s126, %s127
        %s129 = smul.addr %s128, 4
        %s130 = scalar_lea.vmem %s0, %s129
        %s131 = smul.u32 16, %s16
      $region24: #{fe_resnet_forward.2} parent=19 // pred_fallthru
        _
    $region20: #{fe_resnet_forward.2} parent=5 // pred_fallthru
      _
    %p132 = scmp.le.s32.totalorder 1, %s8
    %p133 = scmp.lt.s32.totalorder %s8, 3
    %p134 = pnand %p132, %p133
    %p135 = pneg %p134
    // Predicated region
    $region25: #{fe_resnet_forward.2} parent=5 // pred_check
      _
    $region26: #{fe_resnet_forward.2} parent=5 // pred_check_branch
      %137 = sbr.rel (%p134) target = $region28
    $region27: #{fe_resnet_forward.2} parent=5 // pred_region
      %s138 = ssub.s32 %s8, 1
      %s139 = smul.u32 16, %s18
      %p140 = scmp.lt.s32.totalorder %s17, 1
      %s141 = scalar_select %p140, %s17, 1
      %p142 = scmp.lt.s32.totalorder %s139, 15
      %s143 = scalar_select %p142, %s139, 15
      %s144 = smul.addr %s141, 16
      %s145 = sadd.s32 %s143, %s144
      %s146 = smul.addr %s145, 4
      %s147 = scalar_lea.vmem %s0, %s146
      %p148 = pneg %p48
      %p149 = pneg %p45
      %p150 = pneg %p69
      %p151 = pneg %p66
      %p152 = pneg %p97
      %p153 = pneg %p94
      %p154 = scmp.lt.s32.totalorder %s17, 1
      %s155 = scalar_select %p154, %s17, 1
      %p156 = scmp.lt.s32.totalorder %s18, 0
      %s157 = scalar_select %p156, %s18, 0
      %s158 = sadd.s32 %s157, %s155
      %s159 = smul.addr %s158, 2
      %s160 = scalar_lea.vmem %s2, %s159
      %s161 = smul.u32 16, %s18
      %p162 = scmp.lt.s32.totalorder %s17, 1
      %s163 = scalar_select %p162, %s17, 1
      %p164 = scmp.lt.s32.totalorder %s161, 15
      %s165 = scalar_select %p164, %s161, 15
      %s166 = smul.addr %s163, 16
      %s167 = sadd.s32 %s165, %s166
      %s168 = smul.addr %s167, 4
      %s169 = scalar_lea.vmem %s0, %s168
      %s170 = smul.u32 16, %s18
      %p171 = scmp.lt.s32.totalorder %s17, 1
      %s172 = scalar_select %p171, %s17, 1
      %p173 = scmp.lt.s32.totalorder %s18, 0
      %s174 = scalar_select %p173, %s18, 0
      %s175 = sadd.s32 %s174, %s172
      %s176 = smul.addr %s175, 2
      %s177 = scalar_lea.vmem %s2, %s176
      %v179 = vld [vmem:[%s169] sm:$0xf]
      %v180 = vld [vmem:[%s169 + $0x4] sm:$0xf]
      %v181 = vld [vmem:[%s169 + $0x8] sm:$0xf]
      %v182 = vld [vmem:[%s169 + $0xc] sm:$0xf]
      %v183 = vld [vmem:[%s169 + $0x10] sm:$0xf]
      %v184 = vld [vmem:[%s169 + $0x14] sm:$0xf]
      %v185 = vld [vmem:[%s169 + $0x18] sm:$0xf]
      %v186 = vld [vmem:[%s169 + $0x1c] sm:$0xf]
      %v187 = vld [vmem:[%s169 + $0x20] sm:$0xf]
      %v188 = vld [vmem:[%s169 + $0x24] sm:$0xf]
      %v189 = vld [vmem:[%s169 + $0x28] sm:$0xf]
      %v190 = vld [vmem:[%s169 + $0x2c] sm:$0xf]
      %v191 = vld [vmem:[%s169 + $0x30] sm:$0xf]
      %v192 = vld [vmem:[%s169 + $0x34] sm:$0xf]
      %v193 = vld [vmem:[%s169 + $0x38] sm:$0xf]
      %v194 = vld [vmem:[%s169 + $0x3c] sm:$0xf]
      %v195 = vld [vmem:[%s1] sm:$0xf]
      %v196 = vld [vmem:[%s1 + $0x4] sm:$0xf]
      %v197 = vld [vmem:[%s1 + $0x8] sm:$0xf]
      %v198 = vld [vmem:[%s1 + $0xc] sm:$0xf]
      %v199 = vld [vmem:[%s1 + $0x10] sm:$0xf]
      %v200 = vld [vmem:[%s1 + $0x14] sm:$0xf]
      %v201 = vld [vmem:[%s1 + $0x18] sm:$0x7]
      %v218 = vunpack.c.l.b16 %v179
      %v219 = vunpack.c.l.b16 %v180
      %v220 = vunpack.c.l.b16 %v181
      %v221 = vunpack.c.l.b16 %v182
      %v222 = vunpack.c.l.b16 %v183
      %v223 = vunpack.c.l.b16 %v184
      %v224 = vunpack.c.l.b16 %v185
      %v225 = vunpack.c.l.b16 %v186
      %v226 = vunpack.c.l.b16 %v187
      %v227 = vunpack.c.l.b16 %v188
      %v228 = vunpack.c.l.b16 %v189
      %v229 = vunpack.c.l.b16 %v190
      %v230 = vunpack.c.l.b16 %v191
      %v231 = vunpack.c.l.b16 %v192
      %v232 = vunpack.c.l.b16 %v193
      %v233 = vunpack.c.l.b16 %v194
      %v234 = vpack.c.b16 %v219, %v218
      %v235 = vpack.c.b16 %v221, %v220
      %v236 = vpack.c.b16 %v223, %v222
      %v237 = vpack.c.b16 %v225, %v224
      %v238 = vpack.c.b16 %v227, %v226
      %v239 = vpack.c.b16 %v229, %v228
      %v240 = vpack.c.b16 %v231, %v230
      %v241 = vpack.c.b16 %v233, %v232
      %v249 = vunpack.c.l.b16 %v195
      %v250 = vunpack.c.l.b16 %v196
      %v251 = vunpack.c.l.b16 %v197
      %v252 = vunpack.c.l.b16 %v198
      %v253 = vunpack.c.l.b16 %v199
      %v254 = vunpack.c.l.b16 %v200
      %v255 = vunpack.c.l.b16 %v201
      %v256 = vpack.c.b16 %v250, %v249
      %v257 = vpack.c.b16 %v252, %v251
      %v258 = vpack.c.b16 %v254, %v253
      %v259 = vpack.c.b16 %v255, %v255
      %vm263 = vcmask 441344
      %v265 = vsel %vm263, %v234, 0
      %v268 = vsel %vm263, %v235, 0
      %v271 = vsel %vm263, %v236, 0
      %v274 = vsel %vm263, %v237, 0
      %v277 = vsel %vm263, %v238, 0
      %v280 = vsel %vm263, %v239, 0
      %v283 = vsel %vm263, %v240, 0
      %v286 = vsel %vm263, %v241, 0
      %vm288 = vcmask 1042432
      %v290 = vsel %vm288, %v259, 0
      %292 = vmatprep.subr.bf16.mxu0 0
      %293 = vmatpush1.bf16.msra.mxu0 0
      %294 = vmatprep.subr.bf16.mxu0 0
      %295 = vmatpush1.bf16.msra.mxu0 0
      %296 = vmatprep.subr.bf16.mxu0 0
      %297 = vmatpush1.bf16.msra.mxu0 0
      %298 = vmatprep.subr.bf16.mxu0 0
      %299 = vmatpush1.bf16.msra.mxu0 0
      %300 = vmatprep.subr.bf16.mxu0 0
      %301 = vmatpush1.bf16.msra.mxu0 %v290
      %302 = vmatprep.subr.bf16.mxu0 0
      %303 = vmatpush1.bf16.msra.mxu0 %v258
      %304 = vmatprep.subr.bf16.mxu0 0
      %305 = vmatpush1.bf16.msra.mxu0 %v257
      %306 = vmatprep.subr.bf16.mxu0 0
      %307 = vmatpush1.bf16.msra.mxu0 %v256
      %308 = vmatprep.subr.bf16.mxu0 0
      %309 = vmatpush2.bf16.msra.mxu0 0
      %310 = vmatprep.subr.bf16.mxu0 0
      %311 = vmatpush2.bf16.msra.mxu0 0
      %312 = vmatprep.subr.bf16.mxu0 0
      %313 = vmatpush2.bf16.msra.mxu0 0
      %314 = vmatprep.subr.bf16.mxu0 0
      %315 = vmatpush2.bf16.msra.mxu0 0
      %316 = vmatprep.subr.bf16.mxu0 0
      %317 = vmatpush2.bf16.msra.mxu0 0
      %318 = vmatprep.subr.bf16.mxu0 0
      %319 = vmatpush2.bf16.msra.mxu0 0
      %320 = vmatprep.subr.bf16.mxu0 0
      %321 = vmatpush2.bf16.msra.mxu0 0
      %322 = vmatprep.subr.bf16.mxu0 0
      %323 = vmatpush2.bf16.msra.mxu0 0
      %324 = vmatprep.mubr.bf16.mxu0 0
      %325 = vmatmul.mubr.bf16.gmra.mxu0 %v265
      %v326 = vpop.f32.mrf.mxu0
      %v327 = vadd.f32 0.0, %v326
      %v328 = vpop.f32.mrf.mxu0
      %v329 = vpop.f32.mrf.mxu0
      %v330 = vadd.f32 0.0, %v329
      %v331 = vpop.f32.mrf.mxu0
      %332 = vmatprep.mubr.bf16.mxu0 0
      %333 = vmatmul.mubr.bf16.gmra.mxu0 %v268
      %v334 = vpop.f32.mrf.mxu0
      %v335 = vadd.f32 0.0, %v334
      %v336 = vpop.f32.mrf.mxu0
      %v337 = vpop.f32.mrf.mxu0
      %v338 = vadd.f32 0.0, %v337
      %v339 = vpop.f32.mrf.mxu0
      %340 = vmatprep.mubr.bf16.mxu0 0
      %341 = vmatmul.mubr.bf16.gmra.mxu0 %v271
      %v342 = vpop.f32.mrf.mxu0
      %v343 = vadd.f32 0.0, %v342
      %v344 = vpop.f32.mrf.mxu0
      %v345 = vpop.f32.mrf.mxu0
      %v346 = vadd.f32 0.0, %v345
      %v347 = vpop.f32.mrf.mxu0
      %348 = vmatprep.mubr.bf16.mxu0 0
      %349 = vmatmul.mubr.bf16.gmra.mxu0 %v274
      %v350 = vpop.f32.mrf.mxu0
      %v351 = vadd.f32 0.0, %v350
      %v352 = vpop.f32.mrf.mxu0
      %v353 = vpop.f32.mrf.mxu0
      %v354 = vadd.f32 0.0, %v353
      %v355 = vpop.f32.mrf.mxu0
      %356 = vmatprep.mubr.bf16.mxu0 0
      %357 = vmatmul.mubr.bf16.gmra.mxu0 %v277
      %v358 = vpop.f32.mrf.mxu0
      %v359 = vadd.f32 0.0, %v358
      %v360 = vpop.f32.mrf.mxu0
      %v361 = vpop.f32.mrf.mxu0
      %v362 = vadd.f32 0.0, %v361
      %v363 = vpop.f32.mrf.mxu0
      %364 = vmatprep.mubr.bf16.mxu0 0
      %365 = vmatmul.mubr.bf16.gmra.mxu0 %v280
      %v366 = vpop.f32.mrf.mxu0
      %v367 = vadd.f32 0.0, %v366
      %v368 = vpop.f32.mrf.mxu0
      %v369 = vpop.f32.mrf.mxu0
      %v370 = vadd.f32 0.0, %v369
      %v371 = vpop.f32.mrf.mxu0
      %372 = vmatprep.mubr.bf16.mxu0 0
      %373 = vmatmul.mubr.bf16.gmra.mxu0 %v283
      %v374 = vpop.f32.mrf.mxu0
      %v375 = vadd.f32 0.0, %v374
      %v376 = vpop.f32.mrf.mxu0
      %v377 = vpop.f32.mrf.mxu0
      %v378 = vadd.f32 0.0, %v377
      %v379 = vpop.f32.mrf.mxu0
      %380 = vmatprep.mubr.bf16.mxu0 0
      %381 = vmatmul.mubr.bf16.gmra.mxu0 %v286
      %v382 = vpop.f32.mrf.mxu0
      %v383 = vadd.f32 0.0, %v382
      %v384 = vpop.f32.mrf.mxu0
      %v385 = vpop.f32.mrf.mxu0
      %v386 = vadd.f32 0.0, %v385
      %v387 = vpop.f32.mrf.mxu0
      %388 = vdwg.mxu0
      %v389 = vadd.f32 %v327, %v330
      %v390 = vadd.f32 %v389, %v335
      %v391 = vadd.f32 %v390, %v338
      %v392 = vadd.f32 %v391, %v343
      %v393 = vadd.f32 %v392, %v346
      %v394 = vadd.f32 %v393, %v351
      %v395 = vadd.f32 %v394, %v354
      %v396 = vadd.f32 %v395, %v359
      %v397 = vadd.f32 %v396, %v362
      %v398 = vadd.f32 %v397, %v367
      %v399 = vadd.f32 %v398, %v370
      %v400 = vadd.f32 %v399, %v375
      %v401 = vadd.f32 %v400, %v378
      %v402 = vadd.f32 %v401, %v383
      %v403 = vadd.f32 %v402, %v386
      %v404 = vrot.slane %v403, 4
      %v405 = vadd.f32 %v403, %v404
      %v406 = vrot.slane %v405, 2
      %v407 = vadd.f32 %v405, %v406
      %v408 = vrot.slane %v407, 1
      %v409 = vadd.f32 %v407, %v408
      %v410 = vmul.f32 %v327, %v327
      %v411 = vmul.f32 %v330, %v330
      %v412 = vmul.f32 %v335, %v335
      %v413 = vmul.f32 %v338, %v338
      %v414 = vmul.f32 %v343, %v343
      %v415 = vmul.f32 %v346, %v346
      %v416 = vmul.f32 %v351, %v351
      %v417 = vmul.f32 %v354, %v354
      %v418 = vmul.f32 %v359, %v359
      %v419 = vmul.f32 %v362, %v362
      %v420 = vmul.f32 %v367, %v367
      %v421 = vmul.f32 %v370, %v370
      %v422 = vmul.f32 %v375, %v375
      %v423 = vmul.f32 %v378, %v378
      %v424 = vmul.f32 %v383, %v383
      %v425 = vmul.f32 %v386, %v386
      %v426 = vadd.f32 %v410, %v411
      %v427 = vadd.f32 %v426, %v412
      %v428 = vadd.f32 %v427, %v413
      %v429 = vadd.f32 %v428, %v414
      %v430 = vadd.f32 %v429, %v415
      %v431 = vadd.f32 %v430, %v416
      %v432 = vadd.f32 %v431, %v417
      %v433 = vadd.f32 %v432, %v418
      %v434 = vadd.f32 %v433, %v419
      %v435 = vadd.f32 %v434, %v420
      %v436 = vadd.f32 %v435, %v421
      %v437 = vadd.f32 %v436, %v422
      %v438 = vadd.f32 %v437, %v423
      %v439 = vadd.f32 %v438, %v424
      %v440 = vadd.f32 %v439, %v425
      %v441 = vrot.slane %v440, 4
      %v442 = vadd.f32 %v440, %v441
      %v443 = vrot.slane %v442, 2
      %v444 = vadd.f32 %v442, %v443
      %v445 = vrot.slane %v444, 1
      %v446 = vadd.f32 %v444, %v445
      %vm447 = vcmask 1040384
      %v448 = vsel %vm447, %v409, %v446
      %449 = vst [vmem:[%s177] sm:$0x3] %v448
      %p450 = scmp.lt.s32.totalorder %s17, 1
      %s451 = scalar_select %p450, %s17, 1
      %p452 = scmp.lt.s32.totalorder %s18, 0
      %s453 = scalar_select %p452, %s18, 0
      %s454 = sadd.s32 %s453, %s451
      %s455 = smul.addr %s454, 2
      %s456 = scalar_lea.vmem %s2, %s455
      // Predicated region
      $region29: #{fe_resnet_forward.2} parent=27 // pred_check
        %p457 = pneg %p94
      $region30: #{fe_resnet_forward.2} parent=27 // pred_check_branch
        %459 = sbr.rel (%p457) target = $region32
      $region31: #{fe_resnet_forward.2} parent=27 // pred_region
        _
      $region32: #{fe_resnet_forward.2} parent=27 // pred_fallthru
        _
    $region28: #{fe_resnet_forward.2} parent=5 // pred_fallthru
      _
    %p460 = scmp.le.s32.totalorder 2, %s8
    // Predicated region
    $region33: #{fe_resnet_forward.2} parent=5 // pred_check
      %p461 = pneg %p460
    $region34: #{fe_resnet_forward.2} parent=5 // pred_check_branch
      %463 = sbr.rel (%p461) target = $region36
    $region35: #{fe_resnet_forward.2} parent=5 // pred_region
      %s464 = ssub.s32 %s8, 2
      // Predicated region
      $region37: #{fe_resnet_forward.2} parent=35 // pred_check
        %p465 = pneg %p100
      $region38: #{fe_resnet_forward.2} parent=35 // pred_check_branch
        %467 = sbr.rel (%p465) target = $region40
      $region39: #{fe_resnet_forward.2} parent=35 // pred_region
        %p468 = scmp.lt.s32.totalorder %s19, 1
        %s469 = scalar_select %p468, %s19, 1
        %p470 = scmp.lt.s32.totalorder %s20, 0
        %s471 = scalar_select %p470, %s20, 0
        %s472 = sadd.s32 %s471, %s469
        %s473 = smul.addr %s472, 2
        %s474 = scalar_lea.vmem %s2, %s473
      $region40: #{fe_resnet_forward.2} parent=35 // pred_fallthru
        _
    $region36: #{fe_resnet_forward.2} parent=5 // pred_fallthru
      _
  $region6: #{fe_resnet_forward.2} parent=0 // loop_footer
    %s12 = sadd.s32 1, %s8
  $region7: #{fe_resnet_forward.2} parent=0 // loop_footer_branch
    %7 = sbr.rel target = $region3
  $region8: #{fe_resnet_forward.2} parent=0 // loop_exit
    _

// kernel: fe_resnet_forward.3
$region0: #{fe_resnet_forward.3}
  #allocation0 [shape = 'u32[]', space=smem, size = 0x4, offset = 0x4, fixed_abs, tag = 'smem constant byte address 0x4 - core index']
  #allocation1 [shape = 'u32[144,128]{1,0:T(1,128)}', space=vmem, size = 0x12000, scoped, tag = 'internal scratch']
  %s0 = inlined_call_operand.vmem [shape: bf16[2,16,8,54], index: 0, kind: input, shape index: {}, may-alias: {0,1}]
  %s1 = inlined_call_operand.vmem [shape: bf16[2,16,8,54], index: 1, kind: input, shape index: {}, may-alias: {0,1}]
  %s2 = inlined_call_operand.vmem [shape: bf16[54,128], index: 2, kind: input, shape index: {}]
  %s3 = inlined_call_operand.vmem [shape: f32[2,128], index: 3, kind: input, shape index: {}]
  %s4 = inlined_call_operand.vmem [shape: f32[2,8,512], index: 4, kind: output, shape index: {}]
  %s5 = sld [smem:[#allocation0]]
  $region49: #{fe_resnet_forward.3} parent=0
    _
  %s7 = ssub.s32 1, %s5
  %s8 = scalar_select 0, %s7, %s5
  loop: start=0, step=1, limit=4
  $region2: #{fe_resnet_forward.3} parent=0 // loop_pre_header
    _
  $region3: #{fe_resnet_forward.3} parent=0 // loop_header
    %s10 = sphi 0, %s14
    %p11 = scmp.ge.s32.totalorder %s10, 4
    %s17 = sphi 0, %s29
    %s18 = sphi 0, %s25
    %s19 = sphi 0, %s17
    %s20 = sphi 0, %s18
    %s21 = sphi 0, %s19
    %s22 = sphi 0, %s20
    %s34 = sphi 0, %s36
    %s37 = sphi 0, %s34
    %s38 = sphi 0, %s37
    %s54 = sphi 0, %s38
    %s70 = sphi 0, %s72
    %s73 = sphi 0, %s70
    %s74 = sphi 0, %s73
    %s90 = sphi 0, %s74
    %s94 = sphi 0, %s94
    %s96 = sphi 0, %s94
    %s97 = sphi 0, %s96
    %s111 = sphi 0, %s97
    %s115 = sphi 0, %s115
    %s117 = sphi 0, %s115
    %s118 = sphi 0, %s117
    %s132 = sphi 0, %s118
    %s140 = sphi 0, %s142
    %s143 = sphi 0, %s140
    %s144 = sphi 0, %s143
    %s160 = sphi 0, %s144
  $region4: #{fe_resnet_forward.3} parent=0 // loop_header_branch
    %13 = sbr.rel (%p11) target = $region8
  $region5: #{fe_resnet_forward.3} parent=0 // loop_body
    %s15 = ssub.s32 %s10, 1
    %s16 = ssub.s32 %s10, 2
    %s23 = sadd.s32 1, %s18
    %p24 = scmp.ge.s32.totalorder %s23, 1
    %s25 = scalar_select %p24, 0, %s23
    %s26 = sadd.s32 1, %s17
    %s27 = scalar_select %p24, %s26, %s17
    %p28 = scmp.ge.s32.totalorder %s27, 2
    %s29 = scalar_select %p28, 0, %s27
    %s30 = ssub.s32 %s17, %s29
    %s31 = ssub.s32 %s18, %s25
    %s32 = sor.u32 %s30, %s31
    %p33 = scmp.eq.s32.totalorder %s32, 0
    %s35 = sadd.s32 %s34, 1
    %s36 = scalar_select %p33, %s34, %s35
    %p39 = pneg %p33
    %p40 = scmp.eq.s32.totalorder %s10, 1
    %p41 = por %p39, %p40
    %p42 = scmp.ne.s32.totalorder %s34, %s37
    %p43 = scmp.eq.s32.totalorder %s10, 0
    %p44 = por %p42, %p43
    %p45 = scmp.ne.s32.totalorder %s34, %s37
    %p46 = scmp.eq.s32.totalorder %s15, 1
    %p47 = por %p45, %p46
    %p48 = scmp.ne.s32.totalorder %s37, %s38
    %p49 = scmp.eq.s32.totalorder %s15, 0
    %p50 = por %p48, %p49
    %p51 = scmp.ne.s32.totalorder %s37, %s38
    %p52 = scmp.eq.s32.totalorder %s16, 1
    %p53 = por %p51, %p52
    %p55 = scmp.ne.s32.totalorder %s38, %s54
    %p56 = scmp.eq.s32.totalorder %s16, 0
    %p57 = por %p55, %p56
    %s58 = smul.u32 %s18, 16
    %s59 = ssub.s32 %s58, 1
    %p60 = scmp.gt.s32.totalorder %s59, 0
    %s61 = scalar_select %p60, %s59, 0
    %s62 = smul.u32 %s25, 16
    %s63 = ssub.s32 %s62, 1
    %p64 = scmp.gt.s32.totalorder %s63, 0
    %s65 = scalar_select %p64, %s63, 0
    %s66 = ssub.s32 %s17, %s29
    %s67 = ssub.s32 %s61, %s65
    %s68 = sor.u32 %s66, %s67
    %p69 = scmp.eq.s32.totalorder %s68, 0
    %s71 = sadd.s32 %s70, 1
    %s72 = scalar_select %p69, %s70, %s71
    %p75 = pneg %p69
    %p76 = scmp.eq.s32.totalorder %s10, 1
    %p77 = por %p75, %p76
    %p78 = scmp.ne.s32.totalorder %s70, %s73
    %p79 = scmp.eq.s32.totalorder %s10, 0
    %p80 = por %p78, %p79
    %p81 = scmp.ne.s32.totalorder %s70, %s73
    %p82 = scmp.eq.s32.totalorder %s15, 1
    %p83 = por %p81, %p82
    %p84 = scmp.ne.s32.totalorder %s73, %s74
    %p85 = scmp.eq.s32.totalorder %s15, 0
    %p86 = por %p84, %p85
    %p87 = scmp.ne.s32.totalorder %s73, %s74
    %p88 = scmp.eq.s32.totalorder %s16, 1
    %p89 = por %p87, %p88
    %p91 = scmp.ne.s32.totalorder %s74, %s90
    %p92 = scmp.eq.s32.totalorder %s16, 0
    %p93 = por %p91, %p92
    %s95 = sadd.s32 %s94, 1
    %p98 = scmp.eq.s32.totalorder %s10, 1
    %p99 = scmp.ne.s32.totalorder %s94, %s96
    %p100 = scmp.eq.s32.totalorder %s10, 0
    %p101 = por %p99, %p100
    %p102 = scmp.ne.s32.totalorder %s94, %s96
    %p103 = scmp.eq.s32.totalorder %s15, 1
    %p104 = por %p102, %p103
    %p105 = scmp.ne.s32.totalorder %s96, %s97
    %p106 = scmp.eq.s32.totalorder %s15, 0
    %p107 = por %p105, %p106
    %p108 = scmp.ne.s32.totalorder %s96, %s97
    %p109 = scmp.eq.s32.totalorder %s16, 1
    %p110 = por %p108, %p109
    %p112 = scmp.ne.s32.totalorder %s97, %s111
    %p113 = scmp.eq.s32.totalorder %s16, 0
    %p114 = por %p112, %p113
    %s116 = sadd.s32 %s115, 1
    %p119 = scmp.eq.s32.totalorder %s10, 1
    %p120 = scmp.ne.s32.totalorder %s115, %s117
    %p121 = scmp.eq.s32.totalorder %s10, 0
    %p122 = por %p120, %p121
    %p123 = scmp.ne.s32.totalorder %s115, %s117
    %p124 = scmp.eq.s32.totalorder %s15, 1
    %p125 = por %p123, %p124
    %p126 = scmp.ne.s32.totalorder %s117, %s118
    %p127 = scmp.eq.s32.totalorder %s15, 0
    %p128 = por %p126, %p127
    %p129 = scmp.ne.s32.totalorder %s117, %s118
    %p130 = scmp.eq.s32.totalorder %s16, 1
    %p131 = por %p129, %p130
    %p133 = scmp.ne.s32.totalorder %s118, %s132
    %p134 = scmp.eq.s32.totalorder %s16, 0
    %p135 = por %p133, %p134
    %s136 = ssub.s32 %s17, %s29
    %s137 = ssub.s32 %s18, %s25
    %s138 = sor.u32 %s136, %s137
    %p139 = scmp.eq.s32.totalorder %s138, 0
    %s141 = sadd.s32 %s140, 1
    %s142 = scalar_select %p139, %s140, %s141
    %p145 = pneg %p139
    %p146 = scmp.eq.s32.totalorder %s10, 1
    %p147 = por %p145, %p146
    %p148 = scmp.ne.s32.totalorder %s140, %s143
    %p149 = scmp.eq.s32.totalorder %s10, 0
    %p150 = por %p148, %p149
    %p151 = scmp.ne.s32.totalorder %s140, %s143
    %p152 = scmp.eq.s32.totalorder %s15, 1
    %p153 = por %p151, %p152
    %p154 = scmp.ne.s32.totalorder %s143, %s144
    %p155 = scmp.eq.s32.totalorder %s15, 0
    %p156 = por %p154, %p155
    %p157 = scmp.ne.s32.totalorder %s143, %s144
    %p158 = scmp.eq.s32.totalorder %s16, 1
    %p159 = por %p157, %p158
    %p161 = scmp.ne.s32.totalorder %s144, %s160
    %p162 = scmp.eq.s32.totalorder %s16, 0
    %p163 = por %p161, %p162
    %p164 = scmp.le.s32.totalorder 1, %s10
    %p165 = scmp.lt.s32.totalorder %s10, 3
    %p166 = pnand %p164, %p165
    %p167 = pneg %p166
    // Predicated region
    $region9: #{fe_resnet_forward.3} parent=5 // pred_check
      _
    $region10: #{fe_resnet_forward.3} parent=5 // pred_check_branch
      %169 = sbr.rel (%p166) target = $region12
    $region11: #{fe_resnet_forward.3} parent=5 // pred_region
      %s170 = ssub.s32 %s10, 1
      // Predicated region
      $region13: #{fe_resnet_forward.3} parent=11 // pred_check
        %p171 = pneg %p107
      $region14: #{fe_resnet_forward.3} parent=11 // pred_check_branch
        %173 = sbr.rel (%p171) target = $region16
      $region15: #{fe_resnet_forward.3} parent=11 // pred_region
        _
      $region16: #{fe_resnet_forward.3} parent=11 // pred_fallthru
        _
      // Predicated region
      $region17: #{fe_resnet_forward.3} parent=11 // pred_check
        %p174 = pneg %p128
      $region18: #{fe_resnet_forward.3} parent=11 // pred_check_branch
        %176 = sbr.rel (%p174) target = $region20
      $region19: #{fe_resnet_forward.3} parent=11 // pred_region
        _
      $region20: #{fe_resnet_forward.3} parent=11 // pred_fallthru
        _
    $region12: #{fe_resnet_forward.3} parent=5 // pred_fallthru
      _
    %p177 = scmp.lt.s32.totalorder %s10, 2
    // Predicated region
    $region21: #{fe_resnet_forward.3} parent=5 // pred_check
      %p178 = pneg %p177
    $region22: #{fe_resnet_forward.3} parent=5 // pred_check_branch
      %180 = sbr.rel (%p178) target = $region24
    $region23: #{fe_resnet_forward.3} parent=5 // pred_region
      // Predicated region
      $region25: #{fe_resnet_forward.3} parent=23 // pred_check
        %p181 = pneg %p44
      $region26: #{fe_resnet_forward.3} parent=23 // pred_check_branch
        %183 = sbr.rel (%p181) target = $region28
      $region27: #{fe_resnet_forward.3} parent=23 // pred_region
        %s184 = smul.u32 16, %s18
        %p185 = scmp.lt.s32.totalorder %s17, 1
        %s186 = scalar_select %p185, %s17, 1
        %p187 = scmp.lt.s32.totalorder %s184, 15
        %s188 = scalar_select %p187, %s184, 15
        %s189 = smul.addr %s186, 16
        %s190 = sadd.s32 %s188, %s189
        %s191 = smul.addr %s190, 4
        %s192 = scalar_lea.vmem %s0, %s191
        %s193 = smul.u32 16, %s18
      $region28: #{fe_resnet_forward.3} parent=23 // pred_fallthru
        _
      // Predicated region
      $region29: #{fe_resnet_forward.3} parent=23 // pred_check
        %p194 = pneg %p80
      $region30: #{fe_resnet_forward.3} parent=23 // pred_check_branch
        %196 = sbr.rel (%p194) target = $region32
      $region31: #{fe_resnet_forward.3} parent=23 // pred_region
        %s197 = smul.u32 %s18, 16
        %s198 = ssub.s32 %s197, 1
        %p199 = scmp.gt.s32.totalorder %s198, 0
        %s200 = scalar_select %p199, %s198, 0
        %p201 = scmp.lt.s32.totalorder %s17, 1
        %s202 = scalar_select %p201, %s17, 1
        %p203 = scmp.lt.s32.totalorder %s200, 15
        %s204 = scalar_select %p203, %s200, 15
        %s205 = smul.addr %s202, 16
        %s206 = sadd.s32 %s204, %s205
        %s207 = smul.addr %s206, 4
        %s208 = scalar_lea.vmem %s1, %s207
        %s209 = smul.u32 %s18, 16
        %s210 = ssub.s32 %s209, 1
        %p211 = scmp.gt.s32.totalorder %s210, 0
        %s212 = scalar_select %p211, %s210, 0
      $region32: #{fe_resnet_forward.3} parent=23 // pred_fallthru
        _
    $region24: #{fe_resnet_forward.3} parent=5 // pred_fallthru
      _
    %p213 = scmp.le.s32.totalorder 1, %s10
    %p214 = scmp.lt.s32.totalorder %s10, 3
    %p215 = pnand %p213, %p214
    %p216 = pneg %p215
    // Predicated region
    $region33: #{fe_resnet_forward.3} parent=5 // pred_check
      _
    $region34: #{fe_resnet_forward.3} parent=5 // pred_check_branch
      %218 = sbr.rel (%p215) target = $region36
    $region35: #{fe_resnet_forward.3} parent=5 // pred_region
      %s219 = ssub.s32 %s10, 1
      %s220 = smul.u32 16, %s20
      %p221 = scmp.lt.s32.totalorder %s19, 1
      %s222 = scalar_select %p221, %s19, 1
      %p223 = scmp.lt.s32.totalorder %s220, 15
      %s224 = scalar_select %p223, %s220, 15
      %s225 = smul.addr %s222, 16
      %s226 = sadd.s32 %s224, %s225
      %s227 = smul.addr %s226, 4
      %s228 = scalar_lea.vmem %s0, %s227
      %p229 = pneg %p50
      %p230 = pneg %p47
      %s231 = smul.u32 %s20, 16
      %s232 = ssub.s32 %s231, 1
      %p233 = scmp.gt.s32.totalorder %s232, 0
      %s234 = scalar_select %p233, %s232, 0
      %p235 = scmp.lt.s32.totalorder %s19, 1
      %s236 = scalar_select %p235, %s19, 1
      %p237 = scmp.lt.s32.totalorder %s234, 15
      %s238 = scalar_select %p237, %s234, 15
      %s239 = smul.addr %s236, 16
      %s240 = sadd.s32 %s238, %s239
      %s241 = smul.addr %s240, 4
      %s242 = scalar_lea.vmem %s1, %s241
      %p243 = pneg %p86
      %p244 = pneg %p83
      %p245 = pneg %p107
      %p246 = pneg %p104
      %p247 = pneg %p128
      %p248 = pneg %p125
      %p249 = pneg %p156
      %p250 = pneg %p153
      %p251 = scmp.lt.s32.totalorder %s19, 1
      %s252 = scalar_select %p251, %s19, 1
      %p253 = scmp.lt.s32.totalorder %s20, 0
      %s254 = scalar_select %p253, %s20, 0
      %s255 = smul.addr %s254, 4
      %s256 = smul.addr %s252, 4
      %s257 = sadd.s32 %s255, %s256
      %s258 = smul.addr %s257, 8
      %s259 = scalar_lea.vmem %s4, %s258
      %s260 = smul.u32 16, %s20
      %p261 = scmp.lt.s32.totalorder %s19, 1
      %s262 = scalar_select %p261, %s19, 1
      %p263 = scmp.lt.s32.totalorder %s260, 15
      %s264 = scalar_select %p263, %s260, 15
      %s265 = smul.addr %s262, 16
      %s266 = sadd.s32 %s264, %s265
      %s267 = smul.addr %s266, 4
      %s268 = scalar_lea.vmem %s0, %s267
      %s269 = smul.u32 16, %s20
      %s270 = smul.u32 %s20, 16
      %s271 = ssub.s32 %s270, 1
      %p272 = scmp.gt.s32.totalorder %s271, 0
      %s273 = scalar_select %p272, %s271, 0
      %p274 = scmp.lt.s32.totalorder %s19, 1
      %s275 = scalar_select %p274, %s19, 1
      %p276 = scmp.lt.s32.totalorder %s273, 15
      %s277 = scalar_select %p276, %s273, 15
      %s278 = smul.addr %s275, 16
      %s279 = sadd.s32 %s277, %s278
      %s280 = smul.addr %s279, 4
      %s281 = scalar_lea.vmem %s1, %s280
      %s282 = smul.u32 %s20, 16
      %s283 = ssub.s32 %s282, 1
      %p284 = scmp.gt.s32.totalorder %s283, 0
      %s285 = scalar_select %p284, %s283, 0
      %p286 = scmp.lt.s32.totalorder %s19, 1
      %s287 = scalar_select %p286, %s19, 1
      %p288 = scmp.lt.s32.totalorder %s20, 0
      %s289 = scalar_select %p288, %s20, 0
      %s290 = smul.addr %s289, 4
      %s291 = smul.addr %s287, 4
      %s292 = sadd.s32 %s290, %s291
      %s293 = smul.addr %s292, 8
      %s294 = scalar_lea.vmem %s4, %s293
      %v296 = vld [vmem:[%s3] sm:$0x1]
      %v297 = vld [vmem:[%s3 + $0x1] sm:$0x1]
      %v298 = vld [vmem:[%s268] sm:$0xf]
      %v299 = vld [vmem:[%s268 + $0x4] sm:$0xf]
      %v300 = vld [vmem:[%s268 + $0x8] sm:$0xf]
      %v301 = vld [vmem:[%s268 + $0xc] sm:$0xf]
      %v302 = vld [vmem:[%s268 + $0x10] sm:$0xf]
      %v303 = vld [vmem:[%s268 + $0x14] sm:$0xf]
      %v304 = vld [vmem:[%s268 + $0x18] sm:$0xf]
      %v305 = vld [vmem:[%s268 + $0x1c] sm:$0xf]
      %v306 = vld [vmem:[%s268 + $0x20] sm:$0xf]
      %v307 = vld [vmem:[%s268 + $0x24] sm:$0xf]
      %v308 = vld [vmem:[%s268 + $0x28] sm:$0xf]
      %v309 = vld [vmem:[%s268 + $0x2c] sm:$0xf]
      %v310 = vld [vmem:[%s268 + $0x30] sm:$0xf]
      %v311 = vld [vmem:[%s268 + $0x34] sm:$0xf]
      %v312 = vld [vmem:[%s268 + $0x38] sm:$0xf]
      %v313 = vld [vmem:[%s268 + $0x3c] sm:$0xf]
      %v314 = vld [vmem:[%s2] sm:$0xf]
      %v315 = vld [vmem:[%s2 + $0x4] sm:$0xf]
      %v316 = vld [vmem:[%s2 + $0x8] sm:$0xf]
      %v317 = vld [vmem:[%s2 + $0xc] sm:$0xf]
      %v318 = vld [vmem:[%s2 + $0x10] sm:$0xf]
      %v319 = vld [vmem:[%s2 + $0x14] sm:$0xf]
      %v320 = vld [vmem:[%s2 + $0x18] sm:$0x7]
      %v337 = vunpack.c.l.b16 %v298
      %v338 = vunpack.c.l.b16 %v299
      %v339 = vunpack.c.l.b16 %v300
      %v340 = vunpack.c.l.b16 %v301
      %v341 = vunpack.c.l.b16 %v302
      %v342 = vunpack.c.l.b16 %v303
      %v343 = vunpack.c.l.b16 %v304
      %v344 = vunpack.c.l.b16 %v305
      %v345 = vunpack.c.l.b16 %v306
      %v346 = vunpack.c.l.b16 %v307
      %v347 = vunpack.c.l.b16 %v308
      %v348 = vunpack.c.l.b16 %v309
      %v349 = vunpack.c.l.b16 %v310
      %v350 = vunpack.c.l.b16 %v311
      %v351 = vunpack.c.l.b16 %v312
      %v352 = vunpack.c.l.b16 %v313
      %v353 = vpack.c.b16 %v338, %v337
      %v354 = vpack.c.b16 %v340, %v339
      %v355 = vpack.c.b16 %v342, %v341
      %v356 = vpack.c.b16 %v344, %v343
      %v357 = vpack.c.b16 %v346, %v345
      %v358 = vpack.c.b16 %v348, %v347
      %v359 = vpack.c.b16 %v350, %v349
      %v360 = vpack.c.b16 %v352, %v351
      %v368 = vunpack.c.l.b16 %v314
      %v369 = vunpack.c.l.b16 %v315
      %v370 = vunpack.c.l.b16 %v316
      %v371 = vunpack.c.l.b16 %v317
      %v372 = vunpack.c.l.b16 %v318
      %v373 = vunpack.c.l.b16 %v319
      %v374 = vunpack.c.l.b16 %v320
      %v375 = vpack.c.b16 %v369, %v368
      %v376 = vpack.c.b16 %v371, %v370
      %v377 = vpack.c.b16 %v373, %v372
      %v378 = vpack.c.b16 %v374, %v374
      %vm382 = vcmask 441344
      %v384 = vsel %vm382, %v353, 0
      %v387 = vsel %vm382, %v354, 0
      %v390 = vsel %vm382, %v355, 0
      %v393 = vsel %vm382, %v356, 0
      %v396 = vsel %vm382, %v357, 0
      %v399 = vsel %vm382, %v358, 0
      %v402 = vsel %vm382, %v359, 0
      %v405 = vsel %vm382, %v360, 0
      %vm407 = vcmask 1042432
      %v409 = vsel %vm407, %v378, 0
      %411 = vmatprep.subr.bf16.mxu0 0
      %412 = vmatpush1.bf16.msra.mxu0 0
      %413 = vmatprep.subr.bf16.mxu0 0
      %414 = vmatpush1.bf16.msra.mxu0 0
      %415 = vmatprep.subr.bf16.mxu0 0
      %416 = vmatpush1.bf16.msra.mxu0 0
      %417 = vmatprep.subr.bf16.mxu0 0
      %418 = vmatpush1.bf16.msra.mxu0 0
      %419 = vmatprep.subr.bf16.mxu0 0
      %420 = vmatpush1.bf16.msra.mxu0 %v409
      %421 = vmatprep.subr.bf16.mxu0 0
      %422 = vmatpush1.bf16.msra.mxu0 %v377
      %423 = vmatprep.subr.bf16.mxu0 0
      %424 = vmatpush1.bf16.msra.mxu0 %v376
      %425 = vmatprep.subr.bf16.mxu0 0
      %426 = vmatpush1.bf16.msra.mxu0 %v375
      %427 = vmatprep.subr.bf16.mxu0 0
      %428 = vmatpush2.bf16.msra.mxu0 0
      %429 = vmatprep.subr.bf16.mxu0 0
      %430 = vmatpush2.bf16.msra.mxu0 0
      %431 = vmatprep.subr.bf16.mxu0 0
      %432 = vmatpush2.bf16.msra.mxu0 0
      %433 = vmatprep.subr.bf16.mxu0 0
      %434 = vmatpush2.bf16.msra.mxu0 0
      %435 = vmatprep.subr.bf16.mxu0 0
      %436 = vmatpush2.bf16.msra.mxu0 0
      %437 = vmatprep.subr.bf16.mxu0 0
      %438 = vmatpush2.bf16.msra.mxu0 0
      %439 = vmatprep.subr.bf16.mxu0 0
      %440 = vmatpush2.bf16.msra.mxu0 0
      %441 = vmatprep.subr.bf16.mxu0 0
      %442 = vmatpush2.bf16.msra.mxu0 0
      %443 = vmatprep.mubr.bf16.mxu0 0
      %444 = vmatmul.mubr.bf16.gmra.mxu0 %v384
      %v445 = vpop.f32.mrf.mxu0
      %v446 = vadd.f32 0.0, %v445
      %v447 = vpop.f32.mrf.mxu0
      %v448 = vpop.f32.mrf.mxu0
      %v449 = vadd.f32 0.0, %v448
      %v450 = vpop.f32.mrf.mxu0
      %451 = vmatprep.mubr.bf16.mxu0 0
      %452 = vmatmul.mubr.bf16.gmra.mxu0 %v387
      %v453 = vpop.f32.mrf.mxu0
      %v454 = vadd.f32 0.0, %v453
      %v455 = vpop.f32.mrf.mxu0
      %v456 = vpop.f32.mrf.mxu0
      %v457 = vadd.f32 0.0, %v456
      %v458 = vpop.f32.mrf.mxu0
      %459 = vmatprep.mubr.bf16.mxu0 0
      %460 = vmatmul.mubr.bf16.gmra.mxu0 %v390
      %v461 = vpop.f32.mrf.mxu0
      %v462 = vadd.f32 0.0, %v461
      %v463 = vpop.f32.mrf.mxu0
      %v464 = vpop.f32.mrf.mxu0
      %v465 = vadd.f32 0.0, %v464
      %v466 = vpop.f32.mrf.mxu0
      %467 = vmatprep.mubr.bf16.mxu0 0
      %468 = vmatmul.mubr.bf16.gmra.mxu0 %v393
      %v469 = vpop.f32.mrf.mxu0
      %v470 = vadd.f32 0.0, %v469
      %v471 = vpop.f32.mrf.mxu0
      %v472 = vpop.f32.mrf.mxu0
      %v473 = vadd.f32 0.0, %v472
      %v474 = vpop.f32.mrf.mxu0
      %475 = vmatprep.mubr.bf16.mxu0 0
      %476 = vmatmul.mubr.bf16.gmra.mxu0 %v396
      %v477 = vpop.f32.mrf.mxu0
      %v478 = vadd.f32 0.0, %v477
      %v479 = vpop.f32.mrf.mxu0
      %v480 = vpop.f32.mrf.mxu0
      %v481 = vadd.f32 0.0, %v480
      %v482 = vpop.f32.mrf.mxu0
      %483 = vmatprep.mubr.bf16.mxu0 0
      %484 = vmatmul.mubr.bf16.gmra.mxu0 %v399
      %v485 = vpop.f32.mrf.mxu0
      %v486 = vadd.f32 0.0, %v485
      %v487 = vpop.f32.mrf.mxu0
      %v488 = vpop.f32.mrf.mxu0
      %v489 = vadd.f32 0.0, %v488
      %v490 = vpop.f32.mrf.mxu0
      %491 = vmatprep.mubr.bf16.mxu0 0
      %492 = vmatmul.mubr.bf16.gmra.mxu0 %v402
      %v493 = vpop.f32.mrf.mxu0
      %v494 = vadd.f32 0.0, %v493
      %v495 = vpop.f32.mrf.mxu0
      %v496 = vpop.f32.mrf.mxu0
      %v497 = vadd.f32 0.0, %v496
      %v498 = vpop.f32.mrf.mxu0
      %499 = vmatprep.mubr.bf16.mxu0 0
      %500 = vmatmul.mubr.bf16.gmra.mxu0 %v405
      %v501 = vpop.f32.mrf.mxu0
      %v502 = vadd.f32 0.0, %v501
      %v503 = vpop.f32.mrf.mxu0
      %v504 = vpop.f32.mrf.mxu0
      %v505 = vadd.f32 0.0, %v504
      %v506 = vpop.f32.mrf.mxu0
      %507 = vdwg.mxu0
      %v508 = vlaneseq
      %v509 = vshrl.u32 %v508, 7
      %v510 = vsub.s32 0, %v509
      %v511 = vrot.slane %v296, %v510
      %v512 = vmul.f32 %v446, %v511
      %v513 = vmul.f32 %v449, %v511
      %v514 = vmul.f32 %v454, %v511
      %v515 = vmul.f32 %v457, %v511
      %v516 = vmul.f32 %v462, %v511
      %v517 = vmul.f32 %v465, %v511
      %v518 = vmul.f32 %v470, %v511
      %v519 = vmul.f32 %v473, %v511
      %v520 = vmul.f32 %v478, %v511
      %v521 = vmul.f32 %v481, %v511
      %v522 = vmul.f32 %v486, %v511
      %v523 = vmul.f32 %v489, %v511
      %v524 = vmul.f32 %v494, %v511
      %v525 = vmul.f32 %v497, %v511
      %v526 = vmul.f32 %v502, %v511
      %v527 = vmul.f32 %v505, %v511
      %v528 = vlaneseq
      %v529 = vshrl.u32 %v528, 7
      %v530 = vsub.s32 0, %v529
      %v531 = vrot.slane %v297, %v530
      %v532 = vadd.f32 %v512, %v531
      %v533 = vadd.f32 %v513, %v531
      %v534 = vadd.f32 %v514, %v531
      %v535 = vadd.f32 %v515, %v531
      %v536 = vadd.f32 %v516, %v531
      %v537 = vadd.f32 %v517, %v531
      %v538 = vadd.f32 %v518, %v531
      %v539 = vadd.f32 %v519, %v531
      %v540 = vadd.f32 %v520, %v531
      %v541 = vadd.f32 %v521, %v531
      %v542 = vadd.f32 %v522, %v531
      %v543 = vadd.f32 %v523, %v531
      %v544 = vadd.f32 %v524, %v531
      %v545 = vadd.f32 %v525, %v531
      %v546 = vadd.f32 %v526, %v531
      %v547 = vadd.f32 %v527, %v531
      %v548 = vmax.f32 %v532, 0.0
      %v549 = vmax.f32 %v533, 0.0
      %v550 = vmax.f32 %v534, 0.0
      %v551 = vmax.f32 %v535, 0.0
      %v552 = vmax.f32 %v536, 0.0
      %v553 = vmax.f32 %v537, 0.0
      %v554 = vmax.f32 %v538, 0.0
      %v555 = vmax.f32 %v539, 0.0
      %v556 = vmax.f32 %v540, 0.0
      %v557 = vmax.f32 %v541, 0.0
      %v558 = vmax.f32 %v542, 0.0
      %v559 = vmax.f32 %v543, 0.0
      %v560 = vmax.f32 %v544, 0.0
      %v561 = vmax.f32 %v545, 0.0
      %v562 = vmax.f32 %v546, 0.0
      %v563 = vmax.f32 %v547, 0.0
      %v564 = vrot.slane %v548, 7
      %v565 = vrot.slane %v549, 7
      %v566 = vrot.slane %v550, 7
      %v567 = vrot.slane %v551, 7
      %v568 = vrot.slane %v552, 7
      %v569 = vrot.slane %v553, 7
      %v570 = vrot.slane %v554, 7
      %v571 = vrot.slane %v555, 7
      %v572 = vrot.slane %v556, 7
      %v573 = vrot.slane %v557, 7
      %v574 = vrot.slane %v558, 7
      %v575 = vrot.slane %v559, 7
      %v576 = vrot.slane %v560, 7
      %v577 = vrot.slane %v561, 7
      %v578 = vrot.slane %v562, 7
      %v579 = vrot.slane %v563, 7
      %v580 = vlaneseq
      %v581 = vshrl.u32 %v580, 7
      %vm582 = vcmp.eq.s32.totalorder %v581, 0
      %v583 = vsel %vm582, 0.0, %v564
      %v584 = vsel %vm582, 0.0, %v565
      %v585 = vsel %vm582, 0.0, %v566
      %v586 = vsel %vm582, 0.0, %v567
      %v587 = vsel %vm582, 0.0, %v568
      %v588 = vsel %vm582, 0.0, %v569
      %v589 = vsel %vm582, 0.0, %v570
      %v590 = vsel %vm582, 0.0, %v571
      %v591 = vsel %vm582, 0.0, %v572
      %v592 = vsel %vm582, 0.0, %v573
      %v593 = vsel %vm582, 0.0, %v574
      %v594 = vsel %vm582, 0.0, %v575
      %v595 = vsel %vm582, 0.0, %v576
      %v596 = vsel %vm582, 0.0, %v577
      %v597 = vsel %vm582, 0.0, %v578
      %v598 = vsel %vm582, 0.0, %v579
      %615 = vrot.lane.b32.xlu0 %v548, 64
      %v616 = vpop.permute.xlu0 %615
      %617 = vrot.lane.b32.xlu0 %v549, 64
      %v618 = vpop.permute.xlu0 %617
      %619 = vrot.lane.b32.xlu0 %v550, 64
      %v620 = vpop.permute.xlu0 %619
      %621 = vrot.lane.b32.xlu0 %v551, 64
      %v622 = vpop.permute.xlu0 %621
      %623 = vrot.lane.b32.xlu0 %v552, 64
      %v624 = vpop.permute.xlu0 %623
      %625 = vrot.lane.b32.xlu0 %v553, 64
      %v626 = vpop.permute.xlu0 %625
      %627 = vrot.lane.b32.xlu0 %v554, 64
      %v628 = vpop.permute.xlu0 %627
      %629 = vrot.lane.b32.xlu0 %v555, 64
      %v630 = vpop.permute.xlu0 %629
      %631 = vrot.lane.b32.xlu0 %v556, 64
      %v632 = vpop.permute.xlu0 %631
      %633 = vrot.lane.b32.xlu0 %v557, 64
      %v634 = vpop.permute.xlu0 %633
      %635 = vrot.lane.b32.xlu0 %v558, 64
      %v636 = vpop.permute.xlu0 %635
      %637 = vrot.lane.b32.xlu0 %v559, 64
      %v638 = vpop.permute.xlu0 %637
      %639 = vrot.lane.b32.xlu0 %v560, 64
      %v640 = vpop.permute.xlu0 %639
      %641 = vrot.lane.b32.xlu0 %v561, 64
      %v642 = vpop.permute.xlu0 %641
      %643 = vrot.lane.b32.xlu0 %v562, 64
      %v644 = vpop.permute.xlu0 %643
      %645 = vrot.lane.b32.xlu0 %v563, 64
      %v646 = vpop.permute.xlu0 %645
      %v663 = vmax.f32 %v548, %v616
      %v664 = vmax.f32 %v549, %v618
      %v665 = vmax.f32 %v550, %v620
      %v666 = vmax.f32 %v551, %v622
      %v667 = vmax.f32 %v552, %v624
      %v668 = vmax.f32 %v553, %v626
      %v669 = vmax.f32 %v554, %v628
      %v670 = vmax.f32 %v555, %v630
      %v671 = vmax.f32 %v556, %v632
      %v672 = vmax.f32 %v557, %v634
      %v673 = vmax.f32 %v558, %v636
      %v674 = vmax.f32 %v559, %v638
      %v675 = vmax.f32 %v560, %v640
      %v676 = vmax.f32 %v561, %v642
      %v677 = vmax.f32 %v562, %v644
      %v678 = vmax.f32 %v563, %v646
      %695 = vrot.lane.b32.xlu0 %v583, 64
      %v696 = vpop.permute.xlu0 %695
      %697 = vrot.lane.b32.xlu0 %v584, 64
      %v698 = vpop.permute.xlu0 %697
      %699 = vrot.lane.b32.xlu0 %v585, 64
      %v700 = vpop.permute.xlu0 %699
      %701 = vrot.lane.b32.xlu0 %v586, 64
      %v702 = vpop.permute.xlu0 %701
      %703 = vrot.lane.b32.xlu0 %v587, 64
      %v704 = vpop.permute.xlu0 %703
      %705 = vrot.lane.b32.xlu0 %v588, 64
      %v706 = vpop.permute.xlu0 %705
      %707 = vrot.lane.b32.xlu0 %v589, 64
      %v708 = vpop.permute.xlu0 %707
      %709 = vrot.lane.b32.xlu0 %v590, 64
      %v710 = vpop.permute.xlu0 %709
      %711 = vrot.lane.b32.xlu0 %v591, 64
      %v712 = vpop.permute.xlu0 %711
      %713 = vrot.lane.b32.xlu0 %v592, 64
      %v714 = vpop.permute.xlu0 %713
      %715 = vrot.lane.b32.xlu0 %v593, 64
      %v716 = vpop.permute.xlu0 %715
      %717 = vrot.lane.b32.xlu0 %v594, 64
      %v718 = vpop.permute.xlu0 %717
      %719 = vrot.lane.b32.xlu0 %v595, 64
      %v720 = vpop.permute.xlu0 %719
      %721 = vrot.lane.b32.xlu0 %v596, 64
      %v722 = vpop.permute.xlu0 %721
      %723 = vrot.lane.b32.xlu0 %v597, 64
      %v724 = vpop.permute.xlu0 %723
      %725 = vrot.lane.b32.xlu0 %v598, 64
      %v726 = vpop.permute.xlu0 %725
      %v743 = vmax.f32 %v663, %v696
      %v744 = vmax.f32 %v664, %v698
      %v745 = vmax.f32 %v665, %v700
      %v746 = vmax.f32 %v666, %v702
      %v747 = vmax.f32 %v667, %v704
      %v748 = vmax.f32 %v668, %v706
      %v749 = vmax.f32 %v669, %v708
      %v750 = vmax.f32 %v670, %v710
      %v751 = vmax.f32 %v671, %v712
      %v752 = vmax.f32 %v672, %v714
      %v753 = vmax.f32 %v673, %v716
      %v754 = vmax.f32 %v674, %v718
      %v755 = vmax.f32 %v675, %v720
      %v756 = vmax.f32 %v676, %v722
      %v757 = vmax.f32 %v677, %v724
      %v758 = vmax.f32 %v678, %v726
      %v759 = vld [vmem:[%s281] sm:$0xf]
      %v761 = vsel %vm382, %v759, 0
      %763 = vmatprep.subr.bf16.mxu0 0
      %764 = vmatpush1.bf16.msra.mxu0 0
      %765 = vmatprep.subr.bf16.mxu0 0
      %766 = vmatpush1.bf16.msra.mxu0 0
      %767 = vmatprep.subr.bf16.mxu0 0
      %768 = vmatpush1.bf16.msra.mxu0 0
      %769 = vmatprep.subr.bf16.mxu0 0
      %770 = vmatpush1.bf16.msra.mxu0 0
      %771 = vmatprep.subr.bf16.mxu0 0
      %772 = vmatpush1.bf16.msra.mxu0 %v409
      %773 = vmatprep.subr.bf16.mxu0 0
      %774 = vmatpush1.bf16.msra.mxu0 %v377
      %775 = vmatprep.subr.bf16.mxu0 0
      %776 = vmatpush1.bf16.msra.mxu0 %v376
      %777 = vmatprep.subr.bf16.mxu0 0
      %778 = vmatpush1.bf16.msra.mxu0 %v375
      %779 = vmatprep.subr.bf16.mxu0 0
      %780 = vmatpush2.bf16.msra.mxu0 0
      %781 = vmatprep.subr.bf16.mxu0 0
      %782 = vmatpush2.bf16.msra.mxu0 0
      %783 = vmatprep.subr.bf16.mxu0 0
      %784 = vmatpush2.bf16.msra.mxu0 0
      %785 = vmatprep.subr.bf16.mxu0 0
      %786 = vmatpush2.bf16.msra.mxu0 0
      %787 = vmatprep.subr.bf16.mxu0 0
      %788 = vmatpush2.bf16.msra.mxu0 0
      %789 = vmatprep.subr.bf16.mxu0 0
      %790 = vmatpush2.bf16.msra.mxu0 0
      %791 = vmatprep.subr.bf16.mxu0 0
      %792 = vmatpush2.bf16.msra.mxu0 0
      %793 = vmatprep.subr.bf16.mxu0 0
      %794 = vmatpush2.bf16.msra.mxu0 0
      %795 = vmatprep.mubr.bf16.mxu0 0
      %796 = vmatmul.mubr.bf16.gmra.mxu0 %v761
      %v797 = vpop.f32.mrf.mxu0
      %v798 = vadd.f32 0.0, %v797
      %v799 = vpop.f32.mrf.mxu0
      %v800 = vpop.f32.mrf.mxu0
      %v801 = vpop.f32.mrf.mxu0
      %802 = vdwg.mxu0
      %v803 = vmul.f32 %v798, %v511
      %v804 = vadd.f32 %v803, %v531
      %v805 = vmax.f32 %v804, 0.0
      %v806 = vrot.slane %v805, 7
      %v807 = vsel %vm582, 0.0, %v806
      %809 = vrot.lane.b32.xlu0 %v805, 64
      %v810 = vpop.permute.xlu0 %809
      %v812 = vmax.f32 %v805, %v810
      %814 = vrot.lane.b32.xlu0 %v807, 64
      %v815 = vpop.permute.xlu0 %814
      %v817 = vmax.f32 %v812, %v815
      %p818 = scmp.eq.s32.totalorder %s20, 0
      %s819 = scalar_select %p818, 0.0, 1.0
      %v820 = vstv %s819
      %v821 = vmul.f32 %v817, %v820
      %v822 = vmax.f32 %v743, %v744
      %v823 = vmax.f32 %v745, %v746
      %v824 = vmax.f32 %v747, %v748
      %v825 = vmax.f32 %v749, %v750
      %v826 = vmax.f32 %v751, %v752
      %v827 = vmax.f32 %v753, %v754
      %v828 = vmax.f32 %v755, %v756
      %v829 = vmax.f32 %v757, %v758
      %v830 = vmax.f32 %v822, %v821
      %v831 = vmax.f32 %v823, %v744
      %v832 = vmax.f32 %v824, %v746
      %v833 = vmax.f32 %v825, %v748
      %v834 = vmax.f32 %v826, %v750
      %v835 = vmax.f32 %v827, %v752
      %v836 = vmax.f32 %v828, %v754
      %v837 = vmax.f32 %v829, %v756
      %v838 = vcombine.low %v830, %v832
      %v839 = vcombine.high %v830, %v832
      %v841 = vunpack.c.l.s4 1983009808
      %v842 = vunpack.c.0.s8 %v841
      %v843 = vlaneseq
      %v844 = vshrl.u32 %v843, 7
      %v845 = vsub.s32 %v842, %v844
      %v846 = vrot.slane %v838, %v845
      %v848 = vunpack.c.l.s4 1983009808
      %v849 = vunpack.c.0.s8 %v848
      %v850 = vlaneseq
      %v851 = vshrl.u32 %v850, 7
      %v852 = vsub.s32 %v849, %v851
      %v853 = vrot.slane %v839, %v852
      %v854 = vcombine.low %v831, %v833
      %v855 = vcombine.high %v831, %v833
      %v857 = vunpack.c.l.s4 1983009808
      %v858 = vunpack.c.0.s8 %v857
      %v859 = vlaneseq
      %v860 = vshrl.u32 %v859, 7
      %v861 = vsub.s32 %v858, %v860
      %v862 = vrot.slane %v854, %v861
      %v864 = vunpack.c.l.s4 1983009808
      %v865 = vunpack.c.0.s8 %v864
      %v866 = vlaneseq
      %v867 = vshrl.u32 %v866, 7
      %v868 = vsub.s32 %v865, %v867
      %v869 = vrot.slane %v855, %v868
      %v870 = vcombine.low %v834, %v836
      %v871 = vcombine.high %v834, %v836
      %v873 = vunpack.c.l.s4 1983009808
      %v874 = vunpack.c.0.s8 %v873
      %v875 = vlaneseq
      %v876 = vshrl.u32 %v875, 7
      %v877 = vsub.s32 %v874, %v876
      %v878 = vrot.slane %v870, %v877
      %v880 = vunpack.c.l.s4 1983009808
      %v881 = vunpack.c.0.s8 %v880
      %v882 = vlaneseq
      %v883 = vshrl.u32 %v882, 7
      %v884 = vsub.s32 %v881, %v883
      %v885 = vrot.slane %v871, %v884
      %v886 = vcombine.low %v835, %v837
      %v887 = vcombine.high %v835, %v837
      %v889 = vunpack.c.l.s4 1983009808
      %v890 = vunpack.c.0.s8 %v889
      %v891 = vlaneseq
      %v892 = vshrl.u32 %v891, 7
      %v893 = vsub.s32 %v890, %v892
      %v894 = vrot.slane %v886, %v893
      %v896 = vunpack.c.l.s4 1983009808
      %v897 = vunpack.c.0.s8 %v896
      %v898 = vlaneseq
      %v899 = vshrl.u32 %v898, 7
      %v900 = vsub.s32 %v897, %v899
      %v901 = vrot.slane %v887, %v900
      %v902 = vcombine.low %v846, %v862
      %v903 = vcombine.high %v846, %v862
      %v905 = vunpack.c.l.s4 1934713408
      %v906 = vunpack.c.0.s8 %v905
      %v907 = vlaneseq
      %v908 = vshrl.u32 %v907, 7
      %v909 = vsub.s32 %v906, %v908
      %v910 = vrot.slane %v902, %v909
      %v912 = vunpack.c.l.s4 1934713408
      %v913 = vunpack.c.0.s8 %v912
      %v914 = vlaneseq
      %v915 = vshrl.u32 %v914, 7
      %v916 = vsub.s32 %v913, %v915
      %v917 = vrot.slane %v903, %v916
      %v918 = vcombine.low %v853, %v869
      %v919 = vcombine.high %v853, %v869
      %v921 = vunpack.c.l.s4 1934713408
      %v922 = vunpack.c.0.s8 %v921
      %v923 = vlaneseq
      %v924 = vshrl.u32 %v923, 7
      %v925 = vsub.s32 %v922, %v924
      %v926 = vrot.slane %v918, %v925
      %v928 = vunpack.c.l.s4 1934713408
      %v929 = vunpack.c.0.s8 %v928
      %v930 = vlaneseq
      %v931 = vshrl.u32 %v930, 7
      %v932 = vsub.s32 %v929, %v931
      %v933 = vrot.slane %v919, %v932
      %v934 = vcombine.low %v878, %v894
      %v935 = vcombine.high %v878, %v894
      %v937 = vunpack.c.l.s4 1934713408
      %v938 = vunpack.c.0.s8 %v937
      %v939 = vlaneseq
      %v940 = vshrl.u32 %v939, 7
      %v941 = vsub.s32 %v938, %v940
      %v942 = vrot.slane %v934, %v941
      %v944 = vunpack.c.l.s4 1934713408
      %v945 = vunpack.c.0.s8 %v944
      %v946 = vlaneseq
      %v947 = vshrl.u32 %v946, 7
      %v948 = vsub.s32 %v945, %v947
      %v949 = vrot.slane %v935, %v948
      %v950 = vcombine.low %v885, %v901
      %v951 = vcombine.high %v885, %v901
      %v953 = vunpack.c.l.s4 1934713408
      %v954 = vunpack.c.0.s8 %v953
      %v955 = vlaneseq
      %v956 = vshrl.u32 %v955, 7
      %v957 = vsub.s32 %v954, %v956
      %v958 = vrot.slane %v950, %v957
      %v960 = vunpack.c.l.s4 1934713408
      %v961 = vunpack.c.0.s8 %v960
      %v962 = vlaneseq
      %v963 = vshrl.u32 %v962, 7
      %v964 = vsub.s32 %v961, %v963
      %v965 = vrot.slane %v951, %v964
      %v966 = vcombine.low %v910, %v942
      %v967 = vcombine.high %v910, %v942
      %v968 = vcombine.low %v917, %v949
      %v969 = vcombine.high %v917, %v949
      %v970 = vcombine.low %v926, %v958
      %v971 = vcombine.high %v926, %v958
      %v972 = vcombine.low %v933, %v965
      %v973 = vcombine.high %v933, %v965
      %975 = vrot.lane.b32.xlu0 %v967, 64
      %v976 = vpop.permute.xlu0 %975
      %979 = vrot.lane.b32.xlu0 %v969, 64
      %v980 = vpop.permute.xlu0 %979
      %983 = vrot.lane.b32.xlu0 %v971, 64
      %v984 = vpop.permute.xlu0 %983
      %987 = vrot.lane.b32.xlu0 %v973, 64
      %v988 = vpop.permute.xlu0 %987
      %vm990 = vcmask 523264
      %v991 = vsel %vm990, %v966, %v976
      %v992 = vsel %vm990, %v968, %v980
      %v993 = vsel %vm990, %v970, %v984
      %v994 = vsel %vm990, %v972, %v988
      %995 = vst [vmem:[%s294] sm:$0xff] %v991
      %996 = vst [vmem:[%s294 + $0x8] sm:$0xff] %v992
      %997 = vst [vmem:[%s294 + $0x10] sm:$0xff] %v993
      %998 = vst [vmem:[%s294 + $0x18] sm:$0xff] %v994
      %p999 = scmp.lt.s32.totalorder %s19, 1
      %s1000 = scalar_select %p999, %s19, 1
      %p1001 = scmp.lt.s32.totalorder %s20, 0
      %s1002 = scalar_select %p1001, %s20, 0
      %s1003 = smul.addr %s1002, 4
      %s1004 = smul.addr %s1000, 4
      %s1005 = sadd.s32 %s1003, %s1004
      %s1006 = smul.addr %s1005, 8
      %s1007 = scalar_lea.vmem %s4, %s1006
      // Predicated region
      $region37: #{fe_resnet_forward.3} parent=35 // pred_check
        %p1008 = pneg %p153
      $region38: #{fe_resnet_forward.3} parent=35 // pred_check_branch
        %1010 = sbr.rel (%p1008) target = $region40
      $region39: #{fe_resnet_forward.3} parent=35 // pred_region
        _
      $region40: #{fe_resnet_forward.3} parent=35 // pred_fallthru
        _
    $region36: #{fe_resnet_forward.3} parent=5 // pred_fallthru
      _
    %p1011 = scmp.le.s32.totalorder 2, %s10
    // Predicated region
    $region41: #{fe_resnet_forward.3} parent=5 // pred_check
      %p1012 = pneg %p1011
    $region42: #{fe_resnet_forward.3} parent=5 // pred_check_branch
      %1014 = sbr.rel (%p1012) target = $region44
    $region43: #{fe_resnet_forward.3} parent=5 // pred_region
      %s1015 = ssub.s32 %s10, 2
      // Predicated region
      $region45: #{fe_resnet_forward.3} parent=43 // pred_check
        %p1016 = pneg %p159
      $region46: #{fe_resnet_forward.3} parent=43 // pred_check_branch
        %1018 = sbr.rel (%p1016) target = $region48
      $region47: #{fe_resnet_forward.3} parent=43 // pred_region
        %p1019 = scmp.lt.s32.totalorder %s21, 1
        %s1020 = scalar_select %p1019, %s21, 1
        %p1021 = scmp.lt.s32.totalorder %s22, 0
        %s1022 = scalar_select %p1021, %s22, 0
        %s1023 = smul.addr %s1022, 4
        %s1024 = smul.addr %s1020, 4
        %s1025 = sadd.s32 %s1023, %s1024
        %s1026 = smul.addr %s1025, 8
        %s1027 = scalar_lea.vmem %s4, %s1026
      $region48: #{fe_resnet_forward.3} parent=43 // pred_fallthru
        _
    $region44: #{fe_resnet_forward.3} parent=5 // pred_fallthru
      _
  $region6: #{fe_resnet_forward.3} parent=0 // loop_footer
    %s14 = sadd.s32 1, %s10
  $region7: #{fe_resnet_forward.3} parent=0 // loop_footer_branch
    %9 = sbr.rel target = $region3
  $region8: #{fe_resnet_forward.3} parent=0 // loop_exit
    _

</llo_original>
